<compile_context>
chip_gen: v6e
topology: v6e:2x2x1
jax: 0.10.0
libtpu: 0.0.40
codegen_flags: <defaults>
</compile_context>

<pallas_src>
import functools

import jax
import jax.numpy as jnp
from jax.experimental import pallas as pl
from jax.experimental.pallas import tpu as pltpu


def _round_up(n, m):
    return ((n + m - 1) // m) * m


def _mlp_kernel(x_ref, w_ref, b_ref, out_ref, *, n_layers, pdims, row_offsets,
                compute_dtype):
    """Fused 15-layer MLP on one batch tile.

    x_ref:   (block_b, pdims[0])               activations tile
    w_ref:   (sum_i pdims[i], w_max)           packed lane-padded weights
    b_ref:   (round_up(n_layers, 8), w_max)    packed lane-padded biases (f32)
    out_ref: (block_b, pdims[-1])
    """
    h = x_ref[...]
    for i in range(n_layers):
        kp, np_ = pdims[i], pdims[i + 1]
        off = row_offsets[i]
        w = w_ref[off:off + kp, :np_]                 # static, (8,128)-aligned
        acc = jnp.dot(h, w, preferred_element_type=jnp.float32)
        acc = acc + b_ref[i:i + 1, :np_].astype(jnp.float32)
        if i < n_layers - 1:                          # ReLU after ln1..ln14
            acc = jnp.maximum(acc, 0.0)
            h = acc.astype(compute_dtype)
        else:
            h = acc
    out_ref[...] = h.astype(out_ref.dtype)


def concat_linear_15_pallas(x, weights, biases, *, block_b=None,
                            compute_dtype=jnp.float32):
    """x: (B, input_dim). weights[i]: (in_i, out_i) (already transposed).
    biases[i]: (out_i,)."""
    B, in_dim = x.shape
    n_layers = len(weights)
    out_dim = weights[-1].shape[1]
    out_dtype = x.dtype

    # Per-layer dims, padded up to 128-lane multiples.
    dims = [in_dim] + [w.shape[1] for w in weights]
    pdims = [_round_up(d, 128) for d in dims]
    w_max = max(pdims[1:])

    # Pack weights: each layer padded to (pdims[i], w_max), stacked along rows.
    row_offsets, w_blocks, off = [], [], 0
    for i, w in enumerate(weights):
        kp = pdims[i]
        wp = jnp.pad(w.astype(compute_dtype),
                     ((0, kp - w.shape[0]), (0, w_max - w.shape[1])))
        w_blocks.append(wp)
        row_offsets.append(off)
        off += kp
    w_packed = jnp.concatenate(w_blocks, axis=0)       # (total_rows, w_max)

    # Pack biases (kept f32: bias add / ReLU run in f32). One row per layer.
    n_brows = _round_up(n_layers, 8)
    b_rows = [jnp.pad(b.astype(jnp.float32), (0, w_max - b.shape[0]))
              for b in biases]
    b_rows += [jnp.zeros((w_max,), jnp.float32)] * (n_brows - n_layers)
    b_packed = jnp.stack(b_rows, axis=0)               # (n_brows, w_max)

    # Batch tiling: one big tile for small batches, 512-row tiles otherwise.
    if block_b is None:
        block_b = min(_round_up(B, 8), 512)
    block_b = _round_up(block_b, 8)
    b_pad = _round_up(B, block_b)
    in_pad, out_pad = pdims[0], pdims[-1]

    x_p = jnp.pad(x.astype(compute_dtype),
                  ((0, b_pad - B), (0, in_pad - in_dim)))

    grid = (b_pad // block_b,)

    kernel = functools.partial(
        _mlp_kernel, n_layers=n_layers, pdims=tuple(pdims),
        row_offsets=tuple(row_offsets), compute_dtype=compute_dtype)

    flops = 2 * b_pad * sum(pdims[i] * pdims[i + 1] for i in range(n_layers))
    bytes_accessed = (x_p.size * x_p.dtype.itemsize
                      + w_packed.size * w_packed.dtype.itemsize
                      + b_packed.size * 4
                      + b_pad * out_pad * jnp.dtype(out_dtype).itemsize)

    out_p = pl.pallas_call(
        kernel,
        out_shape=jax.ShapeDtypeStruct((b_pad, out_pad), out_dtype),
        grid_spec=pltpu.PrefetchScalarGridSpec(
            num_scalar_prefetch=0,
            grid=grid,
            in_specs=[
                pl.BlockSpec((block_b, in_pad), lambda i: (i, 0)),
                # Grid-invariant packed weights / biases: one DMA each.
                pl.BlockSpec(w_packed.shape, lambda i: (0, 0)),
                pl.BlockSpec(b_packed.shape, lambda i: (0, 0)),
            ],
            out_specs=pl.BlockSpec((block_b, out_pad), lambda i: (i, 0)),
        ),
        compiler_params=pltpu.CompilerParams(
            dimension_semantics=("parallel",),
        ),
        cost_estimate=pl.CostEstimate(
            flops=flops, transcendentals=0, bytes_accessed=bytes_accessed),
    )(x_p, w_packed, b_packed)

    return out_p[:B, :out_dim]


def make_params(key, input_dim, output_dim):
    """Deterministic PyTorch-style Linear init: U(-1/sqrt(fan_in), 1/sqrt(fan_in))."""
    dims = [
        input_dim,
        input_dim // 2, input_dim // 2,
        input_dim // 4, input_dim // 4,
        input_dim // 8, input_dim // 8,
        input_dim // 16, input_dim // 16,
        input_dim // 8, input_dim // 8,
        input_dim // 4, input_dim // 4,
        input_dim // 2, input_dim // 2,
        output_dim,
    ]
    weights, biases = [], []
    for i in range(15):
        fan_in, fan_out = dims[i], dims[i + 1]
        key, kw, kb = jax.random.split(key, 3)
        bound = 1.0 / jnp.sqrt(jnp.float32(fan_in))
        # Stored already transposed: (in, out)
        w = jax.random.uniform(kw, (fan_in, fan_out), jnp.float32, -bound, bound)
        b = jax.random.uniform(kb, (fan_out,), jnp.float32, -bound, bound)
        weights.append(w)
        biases.append(b)
    return weights, biases


def reference_jax(x, weights, biases):
    h = x
    for i, (w, b) in enumerate(zip(weights, biases)):
        h = h @ w + b
        if i < 14:
            h = jnp.maximum(h, 0.0)
    return h


if __name__ == "__main__":
    input_dim = 256   # must be divisible by 16
    output_dim = 128
    batch = 16

    key = jax.random.PRNGKey(0)
    key, kx = jax.random.split(key)
    x = jax.random.normal(kx, (batch, input_dim), jnp.float32)
    weights, biases = make_params(key, input_dim, output_dim)

    out = concat_linear_15_pallas(x, weights, biases)
    out = jax.block_until_ready(out)

    ref = reference_jax(x, weights, biases)
    assert out.shape == (batch, output_dim)
    assert jnp.allclose(out, ref, atol=1e-3, rtol=1e-3), "mismatch vs reference"

    print("KERNEL_OK")
</pallas_src>

<mosaic_0001>
module attributes {stable_mosaic.version = 11 : i64} {
  func.func @_mlp_kernel(%arg0: i32, %arg1: memref<16x256xf32, #tpu.memory_space<vmem>>, %arg2: memref<2048x128xf32, #tpu.memory_space<vmem>>, %arg3: memref<16x128xf32, #tpu.memory_space<vmem>>, %arg4: memref<16x128xf32, #tpu.memory_space<vmem>>) attributes {dimension_semantics = [#tpu.dimension_semantics<parallel>], iteration_bounds = array<i64: 1>, scalar_prefetch = 0 : i64, scratch_operands = 0 : i64, tpu.core_type = #tpu.core_type<tc>, window_params = [{transform_indices = @transform_0, window_bounds = array<i64: 16, 256>}, {pipeline_mode = #tpu.pipeline_mode<synchronous>, transform_indices = @transform_1, window_bounds = array<i64: 2048, 128>}, {pipeline_mode = #tpu.pipeline_mode<synchronous>, transform_indices = @transform_2, window_bounds = array<i64: 16, 128>}, {transform_indices = @transform_3, window_bounds = array<i64: 16, 128>}]} {
    %c0 = arith.constant 0 : index
    %c0_0 = arith.constant 0 : index
    %0 = vector.load %arg1[%c0, %c0_0] : memref<16x256xf32, #tpu.memory_space<vmem>>, vector<16x256xf32>
    %c0_1 = arith.constant 0 : index
    %c0_2 = arith.constant 0 : index
    %1 = vector.load %arg2[%c0_1, %c0_2] : memref<2048x128xf32, #tpu.memory_space<vmem>>, vector<256x128xf32>
    %cst = arith.constant dense<0.000000e+00> : vector<16x128xf32>
    %2 = tpu.matmul %0, %1, %cst {dimension_numbers = #tpu.dot_dimension_numbers<[1], [0], [0], [1], [0, 0, 1, 1], [], []>} : vector<16x256xf32>, vector<256x128xf32>, vector<16x128xf32> -> vector<16x128xf32>
    %c0_3 = arith.constant 0 : index
    %c0_4 = arith.constant 0 : index
    %3 = vector.load %arg3[%c0_3, %c0_4] : memref<16x128xf32, #tpu.memory_space<vmem>>, vector<1x128xf32>
    %4 = vector.broadcast %3 : vector<1x128xf32> to vector<16x128xf32>
    %5 = arith.addf %2, %4 : vector<16x128xf32>
    %cst_5 = arith.constant 0.000000e+00 : f32
    %6 = vector.broadcast %cst_5 : f32 to vector<16x128xf32>
    %7 = arith.maximumf %5, %6 : vector<16x128xf32>
    %c256 = arith.constant 256 : index
    %c0_6 = arith.constant 0 : index
    %8 = vector.load %arg2[%c256, %c0_6] : memref<2048x128xf32, #tpu.memory_space<vmem>>, vector<128x128xf32>
    %cst_7 = arith.constant dense<0.000000e+00> : vector<16x128xf32>
    %9 = tpu.matmul %7, %8, %cst_7 {dimension_numbers = #tpu.dot_dimension_numbers<[1], [0], [0], [1], [0, 0, 1, 1], [], []>} : vector<16x128xf32>, vector<128x128xf32>, vector<16x128xf32> -> vector<16x128xf32>
    %c1 = arith.constant 1 : index
    %c0_8 = arith.constant 0 : index
    %10 = vector.load %arg3[%c1, %c0_8] : memref<16x128xf32, #tpu.memory_space<vmem>>, vector<1x128xf32>
    %11 = vector.broadcast %10 : vector<1x128xf32> to vector<16x128xf32>
    %12 = arith.addf %9, %11 : vector<16x128xf32>
    %cst_9 = arith.constant 0.000000e+00 : f32
    %13 = vector.broadcast %cst_9 : f32 to vector<16x128xf32>
    %14 = arith.maximumf %12, %13 : vector<16x128xf32>
    %c384 = arith.constant 384 : index
    %c0_10 = arith.constant 0 : index
    %15 = vector.load %arg2[%c384, %c0_10] : memref<2048x128xf32, #tpu.memory_space<vmem>>, vector<128x128xf32>
    %cst_11 = arith.constant dense<0.000000e+00> : vector<16x128xf32>
    %16 = tpu.matmul %14, %15, %cst_11 {dimension_numbers = #tpu.dot_dimension_numbers<[1], [0], [0], [1], [0, 0, 1, 1], [], []>} : vector<16x128xf32>, vector<128x128xf32>, vector<16x128xf32> -> vector<16x128xf32>
    %c2 = arith.constant 2 : index
    %c0_12 = arith.constant 0 : index
    %17 = vector.load %arg3[%c2, %c0_12] : memref<16x128xf32, #tpu.memory_space<vmem>>, vector<1x128xf32>
    %18 = vector.broadcast %17 : vector<1x128xf32> to vector<16x128xf32>
    %19 = arith.addf %16, %18 : vector<16x128xf32>
    %cst_13 = arith.constant 0.000000e+00 : f32
    %20 = vector.broadcast %cst_13 : f32 to vector<16x128xf32>
    %21 = arith.maximumf %19, %20 : vector<16x128xf32>
    %c512 = arith.constant 512 : index
    %c0_14 = arith.constant 0 : index
    %22 = vector.load %arg2[%c512, %c0_14] : memref<2048x128xf32, #tpu.memory_space<vmem>>, vector<128x128xf32>
    %cst_15 = arith.constant dense<0.000000e+00> : vector<16x128xf32>
    %23 = tpu.matmul %21, %22, %cst_15 {dimension_numbers = #tpu.dot_dimension_numbers<[1], [0], [0], [1], [0, 0, 1, 1], [], []>} : vector<16x128xf32>, vector<128x128xf32>, vector<16x128xf32> -> vector<16x128xf32>
    %c3 = arith.constant 3 : index
    %c0_16 = arith.constant 0 : index
    %24 = vector.load %arg3[%c3, %c0_16] : memref<16x128xf32, #tpu.memory_space<vmem>>, vector<1x128xf32>
    %25 = vector.broadcast %24 : vector<1x128xf32> to vector<16x128xf32>
    %26 = arith.addf %23, %25 : vector<16x128xf32>
    %cst_17 = arith.constant 0.000000e+00 : f32
    %27 = vector.broadcast %cst_17 : f32 to vector<16x128xf32>
    %28 = arith.maximumf %26, %27 : vector<16x128xf32>
    %c640 = arith.constant 640 : index
    %c0_18 = arith.constant 0 : index
    %29 = vector.load %arg2[%c640, %c0_18] : memref<2048x128xf32, #tpu.memory_space<vmem>>, vector<128x128xf32>
    %cst_19 = arith.constant dense<0.000000e+00> : vector<16x128xf32>
    %30 = tpu.matmul %28, %29, %cst_19 {dimension_numbers = #tpu.dot_dimension_numbers<[1], [0], [0], [1], [0, 0, 1, 1], [], []>} : vector<16x128xf32>, vector<128x128xf32>, vector<16x128xf32> -> vector<16x128xf32>
    %c4 = arith.constant 4 : index
    %c0_20 = arith.constant 0 : index
    %31 = vector.load %arg3[%c4, %c0_20] : memref<16x128xf32, #tpu.memory_space<vmem>>, vector<1x128xf32>
    %32 = vector.broadcast %31 : vector<1x128xf32> to vector<16x128xf32>
    %33 = arith.addf %30, %32 : vector<16x128xf32>
    %cst_21 = arith.constant 0.000000e+00 : f32
    %34 = vector.broadcast %cst_21 : f32 to vector<16x128xf32>
    %35 = arith.maximumf %33, %34 : vector<16x128xf32>
    %c768 = arith.constant 768 : index
    %c0_22 = arith.constant 0 : index
    %36 = vector.load %arg2[%c768, %c0_22] : memref<2048x128xf32, #tpu.memory_space<vmem>>, vector<128x128xf32>
    %cst_23 = arith.constant dense<0.000000e+00> : vector<16x128xf32>
    %37 = tpu.matmul %35, %36, %cst_23 {dimension_numbers = #tpu.dot_dimension_numbers<[1], [0], [0], [1], [0, 0, 1, 1], [], []>} : vector<16x128xf32>, vector<128x128xf32>, vector<16x128xf32> -> vector<16x128xf32>
    %c5 = arith.constant 5 : index
    %c0_24 = arith.constant 0 : index
    %38 = vector.load %arg3[%c5, %c0_24] : memref<16x128xf32, #tpu.memory_space<vmem>>, vector<1x128xf32>
    %39 = vector.broadcast %38 : vector<1x128xf32> to vector<16x128xf32>
    %40 = arith.addf %37, %39 : vector<16x128xf32>
    %cst_25 = arith.constant 0.000000e+00 : f32
    %41 = vector.broadcast %cst_25 : f32 to vector<16x128xf32>
    %42 = arith.maximumf %40, %41 : vector<16x128xf32>
    %c896 = arith.constant 896 : index
    %c0_26 = arith.constant 0 : index
    %43 = vector.load %arg2[%c896, %c0_26] : memref<2048x128xf32, #tpu.memory_space<vmem>>, vector<128x128xf32>
    %cst_27 = arith.constant dense<0.000000e+00> : vector<16x128xf32>
    %44 = tpu.matmul %42, %43, %cst_27 {dimension_numbers = #tpu.dot_dimension_numbers<[1], [0], [0], [1], [0, 0, 1, 1], [], []>} : vector<16x128xf32>, vector<128x128xf32>, vector<16x128xf32> -> vector<16x128xf32>
    %c6 = arith.constant 6 : index
    %c0_28 = arith.constant 0 : index
    %45 = vector.load %arg3[%c6, %c0_28] : memref<16x128xf32, #tpu.memory_space<vmem>>, vector<1x128xf32>
    %46 = vector.broadcast %45 : vector<1x128xf32> to vector<16x128xf32>
    %47 = arith.addf %44, %46 : vector<16x128xf32>
    %cst_29 = arith.constant 0.000000e+00 : f32
    %48 = vector.broadcast %cst_29 : f32 to vector<16x128xf32>
    %49 = arith.maximumf %47, %48 : vector<16x128xf32>
    %c1024 = arith.constant 1024 : index
    %c0_30 = arith.constant 0 : index
    %50 = vector.load %arg2[%c1024, %c0_30] : memref<2048x128xf32, #tpu.memory_space<vmem>>, vector<128x128xf32>
    %cst_31 = arith.constant dense<0.000000e+00> : vector<16x128xf32>
    %51 = tpu.matmul %49, %50, %cst_31 {dimension_numbers = #tpu.dot_dimension_numbers<[1], [0], [0], [1], [0, 0, 1, 1], [], []>} : vector<16x128xf32>, vector<128x128xf32>, vector<16x128xf32> -> vector<16x128xf32>
    %c7 = arith.constant 7 : index
    %c0_32 = arith.constant 0 : index
    %52 = vector.load %arg3[%c7, %c0_32] : memref<16x128xf32, #tpu.memory_space<vmem>>, vector<1x128xf32>
    %53 = vector.broadcast %52 : vector<1x128xf32> to vector<16x128xf32>
    %54 = arith.addf %51, %53 : vector<16x128xf32>
    %cst_33 = arith.constant 0.000000e+00 : f32
    %55 = vector.broadcast %cst_33 : f32 to vector<16x128xf32>
    %56 = arith.maximumf %54, %55 : vector<16x128xf32>
    %c1152 = arith.constant 1152 : index
    %c0_34 = arith.constant 0 : index
    %57 = vector.load %arg2[%c1152, %c0_34] : memref<2048x128xf32, #tpu.memory_space<vmem>>, vector<128x128xf32>
    %cst_35 = arith.constant dense<0.000000e+00> : vector<16x128xf32>
    %58 = tpu.matmul %56, %57, %cst_35 {dimension_numbers = #tpu.dot_dimension_numbers<[1], [0], [0], [1], [0, 0, 1, 1], [], []>} : vector<16x128xf32>, vector<128x128xf32>, vector<16x128xf32> -> vector<16x128xf32>
    %c8 = arith.constant 8 : index
    %c0_36 = arith.constant 0 : index
    %59 = vector.load %arg3[%c8, %c0_36] : memref<16x128xf32, #tpu.memory_space<vmem>>, vector<1x128xf32>
    %60 = vector.broadcast %59 : vector<1x128xf32> to vector<16x128xf32>
    %61 = arith.addf %58, %60 : vector<16x128xf32>
    %cst_37 = arith.constant 0.000000e+00 : f32
    %62 = vector.broadcast %cst_37 : f32 to vector<16x128xf32>
    %63 = arith.maximumf %61, %62 : vector<16x128xf32>
    %c1280 = arith.constant 1280 : index
    %c0_38 = arith.constant 0 : index
    %64 = vector.load %arg2[%c1280, %c0_38] : memref<2048x128xf32, #tpu.memory_space<vmem>>, vector<128x128xf32>
    %cst_39 = arith.constant dense<0.000000e+00> : vector<16x128xf32>
    %65 = tpu.matmul %63, %64, %cst_39 {dimension_numbers = #tpu.dot_dimension_numbers<[1], [0], [0], [1], [0, 0, 1, 1], [], []>} : vector<16x128xf32>, vector<128x128xf32>, vector<16x128xf32> -> vector<16x128xf32>
    %c9 = arith.constant 9 : index
    %c0_40 = arith.constant 0 : index
    %66 = vector.load %arg3[%c9, %c0_40] : memref<16x128xf32, #tpu.memory_space<vmem>>, vector<1x128xf32>
    %67 = vector.broadcast %66 : vector<1x128xf32> to vector<16x128xf32>
    %68 = arith.addf %65, %67 : vector<16x128xf32>
    %cst_41 = arith.constant 0.000000e+00 : f32
    %69 = vector.broadcast %cst_41 : f32 to vector<16x128xf32>
    %70 = arith.maximumf %68, %69 : vector<16x128xf32>
    %c1408 = arith.constant 1408 : index
    %c0_42 = arith.constant 0 : index
    %71 = vector.load %arg2[%c1408, %c0_42] : memref<2048x128xf32, #tpu.memory_space<vmem>>, vector<128x128xf32>
    %cst_43 = arith.constant dense<0.000000e+00> : vector<16x128xf32>
    %72 = tpu.matmul %70, %71, %cst_43 {dimension_numbers = #tpu.dot_dimension_numbers<[1], [0], [0], [1], [0, 0, 1, 1], [], []>} : vector<16x128xf32>, vector<128x128xf32>, vector<16x128xf32> -> vector<16x128xf32>
    %c10 = arith.constant 10 : index
    %c0_44 = arith.constant 0 : index
    %73 = vector.load %arg3[%c10, %c0_44] : memref<16x128xf32, #tpu.memory_space<vmem>>, vector<1x128xf32>
    %74 = vector.broadcast %73 : vector<1x128xf32> to vector<16x128xf32>
    %75 = arith.addf %72, %74 : vector<16x128xf32>
    %cst_45 = arith.constant 0.000000e+00 : f32
    %76 = vector.broadcast %cst_45 : f32 to vector<16x128xf32>
    %77 = arith.maximumf %75, %76 : vector<16x128xf32>
    %c1536 = arith.constant 1536 : index
    %c0_46 = arith.constant 0 : index
    %78 = vector.load %arg2[%c1536, %c0_46] : memref<2048x128xf32, #tpu.memory_space<vmem>>, vector<128x128xf32>
    %cst_47 = arith.constant dense<0.000000e+00> : vector<16x128xf32>
    %79 = tpu.matmul %77, %78, %cst_47 {dimension_numbers = #tpu.dot_dimension_numbers<[1], [0], [0], [1], [0, 0, 1, 1], [], []>} : vector<16x128xf32>, vector<128x128xf32>, vector<16x128xf32> -> vector<16x128xf32>
    %c11 = arith.constant 11 : index
    %c0_48 = arith.constant 0 : index
    %80 = vector.load %arg3[%c11, %c0_48] : memref<16x128xf32, #tpu.memory_space<vmem>>, vector<1x128xf32>
    %81 = vector.broadcast %80 : vector<1x128xf32> to vector<16x128xf32>
    %82 = arith.addf %79, %81 : vector<16x128xf32>
    %cst_49 = arith.constant 0.000000e+00 : f32
    %83 = vector.broadcast %cst_49 : f32 to vector<16x128xf32>
    %84 = arith.maximumf %82, %83 : vector<16x128xf32>
    %c1664 = arith.constant 1664 : index
    %c0_50 = arith.constant 0 : index
    %85 = vector.load %arg2[%c1664, %c0_50] : memref<2048x128xf32, #tpu.memory_space<vmem>>, vector<128x128xf32>
    %cst_51 = arith.constant dense<0.000000e+00> : vector<16x128xf32>
    %86 = tpu.matmul %84, %85, %cst_51 {dimension_numbers = #tpu.dot_dimension_numbers<[1], [0], [0], [1], [0, 0, 1, 1], [], []>} : vector<16x128xf32>, vector<128x128xf32>, vector<16x128xf32> -> vector<16x128xf32>
    %c12 = arith.constant 12 : index
    %c0_52 = arith.constant 0 : index
    %87 = vector.load %arg3[%c12, %c0_52] : memref<16x128xf32, #tpu.memory_space<vmem>>, vector<1x128xf32>
    %88 = vector.broadcast %87 : vector<1x128xf32> to vector<16x128xf32>
    %89 = arith.addf %86, %88 : vector<16x128xf32>
    %cst_53 = arith.constant 0.000000e+00 : f32
    %90 = vector.broadcast %cst_53 : f32 to vector<16x128xf32>
    %91 = arith.maximumf %89, %90 : vector<16x128xf32>
    %c1792 = arith.constant 1792 : index
    %c0_54 = arith.constant 0 : index
    %92 = vector.load %arg2[%c1792, %c0_54] : memref<2048x128xf32, #tpu.memory_space<vmem>>, vector<128x128xf32>
    %cst_55 = arith.constant dense<0.000000e+00> : vector<16x128xf32>
    %93 = tpu.matmul %91, %92, %cst_55 {dimension_numbers = #tpu.dot_dimension_numbers<[1], [0], [0], [1], [0, 0, 1, 1], [], []>} : vector<16x128xf32>, vector<128x128xf32>, vector<16x128xf32> -> vector<16x128xf32>
    %c13 = arith.constant 13 : index
    %c0_56 = arith.constant 0 : index
    %94 = vector.load %arg3[%c13, %c0_56] : memref<16x128xf32, #tpu.memory_space<vmem>>, vector<1x128xf32>
    %95 = vector.broadcast %94 : vector<1x128xf32> to vector<16x128xf32>
    %96 = arith.addf %93, %95 : vector<16x128xf32>
    %cst_57 = arith.constant 0.000000e+00 : f32
    %97 = vector.broadcast %cst_57 : f32 to vector<16x128xf32>
    %98 = arith.maximumf %96, %97 : vector<16x128xf32>
    %c1920 = arith.constant 1920 : index
    %c0_58 = arith.constant 0 : index
    %99 = vector.load %arg2[%c1920, %c0_58] : memref<2048x128xf32, #tpu.memory_space<vmem>>, vector<128x128xf32>
    %cst_59 = arith.constant dense<0.000000e+00> : vector<16x128xf32>
    %100 = tpu.matmul %98, %99, %cst_59 {dimension_numbers = #tpu.dot_dimension_numbers<[1], [0], [0], [1], [0, 0, 1, 1], [], []>} : vector<16x128xf32>, vector<128x128xf32>, vector<16x128xf32> -> vector<16x128xf32>
    %c14 = arith.constant 14 : index
    %c0_60 = arith.constant 0 : index
    %101 = vector.load %arg3[%c14, %c0_60] : memref<16x128xf32, #tpu.memory_space<vmem>>, vector<1x128xf32>
    %102 = vector.broadcast %101 : vector<1x128xf32> to vector<16x128xf32>
    %103 = arith.addf %100, %102 : vector<16x128xf32>
    %c0_61 = arith.constant 0 : index
    %c0_62 = arith.constant 0 : index
    %104 = vector.load %arg4[%c0_61, %c0_62] : memref<16x128xf32, #tpu.memory_space<vmem>>, vector<16x128xf32>
    tpu.vector_store %arg4[%c0_61, %c0_62], %103 {strides = array<i32>} : memref<16x128xf32, #tpu.memory_space<vmem>>, vector<16x128xf32>,
    return
  }
  func.func @transform_0(%arg0: i32) -> (i32, i32) {
    %c0_i32 = arith.constant 0 : i32
    %c0_i32_0 = arith.constant 0 : i32
    return %arg0, %c0_i32 : i32, i32
  }
  func.func @transform_1(%arg0: i32) -> (i32, i32) {
    %c0_i32 = arith.constant 0 : i32
    %c0_i32_0 = arith.constant 0 : i32
    %c0_i32_1 = arith.constant 0 : i32
    return %c0_i32, %c0_i32_0 : i32, i32
  }
  func.func @transform_2(%arg0: i32) -> (i32, i32) {
    %c0_i32 = arith.constant 0 : i32
    %c0_i32_0 = arith.constant 0 : i32
    %c0_i32_1 = arith.constant 0 : i32
    return %c0_i32, %c0_i32_0 : i32, i32
  }
  func.func @transform_3(%arg0: i32) -> (i32, i32) {
    %c0_i32 = arith.constant 0 : i32
    %c0_i32_0 = arith.constant 0 : i32
    return %arg0, %c0_i32 : i32, i32
  }
}

</mosaic_0001>

<llo_original>
// kernel: tpu_custom_call.1
$region0: #{tpu_custom_call.1}
  #allocation0 [shape = 'u32[]', space=smem, size = 0x4, offset = 0x4, fixed_abs, tag = 'smem constant byte address 0x4 - core index']
  #allocation1 [shape = 'u32[144,128]{1,0:T(1,128)}', space=vmem, size = 0x12000, scoped, tag = 'internal scratch']
  %s0 = inlined_call_operand.hbm [shape: f32[16,256], index: 0, kind: input, shape index: {}]
  %s1 = inlined_call_operand.hbm [shape: f32[2048,128], index: 1, kind: input, shape index: {}]
  %s2 = inlined_call_operand.hbm [shape: f32[16,128], index: 2, kind: input, shape index: {}]
  %s3 = inlined_call_operand.hbm [shape: f32[16,128], index: 3, kind: output, shape index: {}]
  %s4 = sld [smem:[#allocation0]]
  $region34: #{tpu_custom_call.1} parent=0
    _
  %s6 = ssub.s32 1, %s4
  %s7 = scalar_select 0, %s6, %s4
  $region1: #{tpu_custom_call.1} parent=0
    #allocation2 [shape = 'u8[16384]{0}', space=vmem, size = 0x4000, scoped, tag = 'input window, operand 0, single buffered']
    #allocation3 [shape = 's32[1]{0}', space=sflag, size = 0x4, scoped, tag = 'scoped memory for tpu_custom_call.1']
    #allocation4 [shape = 's32[1]{0}', space=sflag, size = 0x4, scoped, tag = 'scoped memory for tpu_custom_call.1']
    #allocation5 [shape = 'u8[1048576]{0}', space=vmem, size = 0x100000, scoped, tag = 'input window, operand 1, single buffered']
    #allocation6 [shape = 's32[1]{0}', space=sflag, size = 0x4, scoped, tag = 'scoped memory for tpu_custom_call.1']
    #allocation7 [shape = 'u8[8192]{0}', space=vmem, size = 0x2000, scoped, tag = 'input window, operand 2, single buffered']
    #allocation8 [shape = 'u8[8192]{0}', space=vmem, size = 0x2000, scoped, tag = 'output window, operand 0, single buffered']
    %8 = vsyncpa [#allocation3], 0
    %9 = vsyncpa [#allocation6], 0
    %10 = vsyncpa [#allocation4], 0
    // Predicated region
    $region2: #{tpu_custom_call.1} parent=1 // pred_check
      _
    $region3: #{tpu_custom_call.1} parent=1 // pred_check_branch
      %12 = sbr.rel (0) target = $region5
    $region4: #{tpu_custom_call.1} parent=1 // pred_region
      %s14 = ssub.s32 512, 512
      %15 = vsyncadd [#allocation3], %s14
      %s16 = sshll.u32 [#allocation2], 4
      %s17 = int_to_ptr.vmem [resolvable:$true] %s16
      %22 = dma.hbm_to_vmem [thread:$0]  %s0, 512, %s17, [#allocation3], 256, 256, 16
    $region5: #{tpu_custom_call.1} parent=1 // pred_fallthru
      _
    // Predicated region
    $region6: #{tpu_custom_call.1} parent=1 // pred_check
      _
    $region7: #{tpu_custom_call.1} parent=1 // pred_check_branch
      %24 = sbr.rel (0) target = $region9
    $region8: #{tpu_custom_call.1} parent=1 // pred_region
      %s26 = ssub.s32 32768, 32768
      %27 = vsyncadd [#allocation6], %s26
      %s28 = sshll.u32 [#allocation5], 4
      %s29 = int_to_ptr.vmem [resolvable:$true] %s28
      %34 = dma.hbm_to_vmem [thread:$0]  %s1, 32768, %s29, [#allocation6], 128, 128, 8
    $region9: #{tpu_custom_call.1} parent=1 // pred_fallthru
      _
    // Predicated region
    $region10: #{tpu_custom_call.1} parent=1 // pred_check
      _
    $region11: #{tpu_custom_call.1} parent=1 // pred_check_branch
      %36 = sbr.rel (0) target = $region13
    $region12: #{tpu_custom_call.1} parent=1 // pred_region
      %s38 = ssub.s32 256, 256
      %39 = vsyncadd [#allocation6], %s38
      %s40 = sshll.u32 [#allocation7], 4
      %s41 = int_to_ptr.vmem [resolvable:$true] %s40
      %46 = dma.hbm_to_vmem [thread:$0]  %s2, 256, %s41, [#allocation6], 128, 128, 8
    $region13: #{tpu_custom_call.1} parent=1 // pred_fallthru
      _
    // Predicated region
    $region14: #{tpu_custom_call.1} parent=1 // pred_check
      _
    $region15: #{tpu_custom_call.1} parent=1 // pred_check_branch
      %48 = sbr.rel (0) target = $region17
    $region16: #{tpu_custom_call.1} parent=1 // pred_region
      %49 = dma.done [#allocation3], 512
    $region17: #{tpu_custom_call.1} parent=1 // pred_fallthru
      _
    // Predicated region
    $region18: #{tpu_custom_call.1} parent=1 // pred_check
      _
    $region19: #{tpu_custom_call.1} parent=1 // pred_check_branch
      %51 = sbr.rel (0) target = $region21
    $region20: #{tpu_custom_call.1} parent=1 // pred_region
      %52 = dma.done [#allocation6], 32768
    $region21: #{tpu_custom_call.1} parent=1 // pred_fallthru
      _
    // Predicated region
    $region22: #{tpu_custom_call.1} parent=1 // pred_check
      _
    $region23: #{tpu_custom_call.1} parent=1 // pred_check_branch
      %54 = sbr.rel (0) target = $region25
    $region24: #{tpu_custom_call.1} parent=1 // pred_region
      %55 = dma.done [#allocation6], 256
    $region25: #{tpu_custom_call.1} parent=1 // pred_fallthru
      _
    %v56 = vld [vmem:[#allocation2] sm:$0xff]
    %v57 = vld [vmem:[#allocation2 + $0x8] sm:$0xff]
    %v58 = vld [vmem:[#allocation2 + $0x10] sm:$0xff]
    %v59 = vld [vmem:[#allocation2 + $0x18] sm:$0xff]
    %v60 = vld [vmem:[#allocation5] sm:$0xff]
    %v61 = vld [vmem:[#allocation5 + $0x8] sm:$0xff]
    %v62 = vld [vmem:[#allocation5 + $0x10] sm:$0xff]
    %v63 = vld [vmem:[#allocation5 + $0x18] sm:$0xff]
    %v64 = vld [vmem:[#allocation5 + $0x20] sm:$0xff]
    %v65 = vld [vmem:[#allocation5 + $0x28] sm:$0xff]
    %v66 = vld [vmem:[#allocation5 + $0x30] sm:$0xff]
    %v67 = vld [vmem:[#allocation5 + $0x38] sm:$0xff]
    %v68 = vld [vmem:[#allocation5 + $0x40] sm:$0xff]
    %v69 = vld [vmem:[#allocation5 + $0x48] sm:$0xff]
    %v70 = vld [vmem:[#allocation5 + $0x50] sm:$0xff]
    %v71 = vld [vmem:[#allocation5 + $0x58] sm:$0xff]
    %v72 = vld [vmem:[#allocation5 + $0x60] sm:$0xff]
    %v73 = vld [vmem:[#allocation5 + $0x68] sm:$0xff]
    %v74 = vld [vmem:[#allocation5 + $0x70] sm:$0xff]
    %v75 = vld [vmem:[#allocation5 + $0x78] sm:$0xff]
    %v76 = vld [vmem:[#allocation5 + $0x80] sm:$0xff]
    %v77 = vld [vmem:[#allocation5 + $0x88] sm:$0xff]
    %v78 = vld [vmem:[#allocation5 + $0x90] sm:$0xff]
    %v79 = vld [vmem:[#allocation5 + $0x98] sm:$0xff]
    %v80 = vld [vmem:[#allocation5 + $0xa0] sm:$0xff]
    %v81 = vld [vmem:[#allocation5 + $0xa8] sm:$0xff]
    %v82 = vld [vmem:[#allocation5 + $0xb0] sm:$0xff]
    %v83 = vld [vmem:[#allocation5 + $0xb8] sm:$0xff]
    %v84 = vld [vmem:[#allocation5 + $0xc0] sm:$0xff]
    %v85 = vld [vmem:[#allocation5 + $0xc8] sm:$0xff]
    %v86 = vld [vmem:[#allocation5 + $0xd0] sm:$0xff]
    %v87 = vld [vmem:[#allocation5 + $0xd8] sm:$0xff]
    %v88 = vld [vmem:[#allocation5 + $0xe0] sm:$0xff]
    %v89 = vld [vmem:[#allocation5 + $0xe8] sm:$0xff]
    %v90 = vld [vmem:[#allocation5 + $0xf0] sm:$0xff]
    %v91 = vld [vmem:[#allocation5 + $0xf8] sm:$0xff]
    %v92 = vld [vmem:[#allocation7] sm:$0x1]
    %v93 = vlaneseq
    %v94 = vshrl.u32 %v93, 7
    %v95 = vsub.s32 0, %v94
    %v96 = vrot.slane %v92, %v95
    %97 = vmatprep.subr.mxu0 0.0
    %98 = vmatpush1.msra.mxu0 %v75
    %99 = vmatprep.subr.mxu0 0.0
    %100 = vmatpush1.msra.mxu0 %v74
    %101 = vmatprep.subr.mxu0 0.0
    %102 = vmatpush1.msra.mxu0 %v73
    %103 = vmatprep.subr.mxu0 0.0
    %104 = vmatpush1.msra.mxu0 %v72
    %105 = vmatprep.subr.mxu0 0.0
    %106 = vmatpush1.msra.mxu0 %v71
    %107 = vmatprep.subr.mxu0 0.0
    %108 = vmatpush1.msra.mxu0 %v70
    %109 = vmatprep.subr.mxu0 0.0
    %110 = vmatpush1.msra.mxu0 %v69
    %111 = vmatprep.subr.mxu0 0.0
    %112 = vmatpush1.msra.mxu0 %v68
    %113 = vmatprep.subr.mxu0 0.0
    %114 = vmatpush1.msra.mxu0 %v67
    %115 = vmatprep.subr.mxu0 0.0
    %116 = vmatpush1.msra.mxu0 %v66
    %117 = vmatprep.subr.mxu0 0.0
    %118 = vmatpush1.msra.mxu0 %v65
    %119 = vmatprep.subr.mxu0 0.0
    %120 = vmatpush1.msra.mxu0 %v64
    %121 = vmatprep.subr.mxu0 0.0
    %122 = vmatpush1.msra.mxu0 %v63
    %123 = vmatprep.subr.mxu0 0.0
    %124 = vmatpush1.msra.mxu0 %v62
    %125 = vmatprep.subr.mxu0 0.0
    %126 = vmatpush1.msra.mxu0 %v61
    %127 = vmatprep.subr.mxu0 0.0
    %128 = vmatpush1.msra.mxu0 %v60
    %129 = vmatprep.subr.mxu0 0.0
    %130 = vmatpush2.msra.mxu0 %v91
    %131 = vmatprep.subr.mxu0 0.0
    %132 = vmatpush2.msra.mxu0 %v90
    %133 = vmatprep.subr.mxu0 0.0
    %134 = vmatpush2.msra.mxu0 %v89
    %135 = vmatprep.subr.mxu0 0.0
    %136 = vmatpush2.msra.mxu0 %v88
    %137 = vmatprep.subr.mxu0 0.0
    %138 = vmatpush2.msra.mxu0 %v87
    %139 = vmatprep.subr.mxu0 0.0
    %140 = vmatpush2.msra.mxu0 %v86
    %141 = vmatprep.subr.mxu0 0.0
    %142 = vmatpush2.msra.mxu0 %v85
    %143 = vmatprep.subr.mxu0 0.0
    %144 = vmatpush2.msra.mxu0 %v84
    %145 = vmatprep.subr.mxu0 0.0
    %146 = vmatpush2.msra.mxu0 %v83
    %147 = vmatprep.subr.mxu0 0.0
    %148 = vmatpush2.msra.mxu0 %v82
    %149 = vmatprep.subr.mxu0 0.0
    %150 = vmatpush2.msra.mxu0 %v81
    %151 = vmatprep.subr.mxu0 0.0
    %152 = vmatpush2.msra.mxu0 %v80
    %153 = vmatprep.subr.mxu0 0.0
    %154 = vmatpush2.msra.mxu0 %v79
    %155 = vmatprep.subr.mxu0 0.0
    %156 = vmatpush2.msra.mxu0 %v78
    %157 = vmatprep.subr.mxu0 0.0
    %158 = vmatpush2.msra.mxu0 %v77
    %159 = vmatprep.subr.mxu0 0.0
    %160 = vmatpush2.msra.mxu0 %v76
    %161 = vmatprep.mubr.f32.mxu0 %v57
    %162 = vmatmul.mubr.f32.gmra.mxu0 %v56
    %v163 = vpop.f32.mrf.mxu0
    %v164 = vadd.f32 %v96, %v163
    %v165 = vpop.f32.mrf.mxu0
    %166 = vmatprep.mubr.f32.mxu0 %v59
    %167 = vmatmul.mubr.f32.gmra.mxu0 %v58
    %v168 = vpop.f32.mrf.mxu0
    %v169 = vadd.f32 %v96, %v168
    %v170 = vpop.f32.mrf.mxu0
    %171 = vdwg.mxu0
    %v172 = vmax.f32 %v164, 0.0
    %v173 = vmax.f32 %v169, 0.0
    %v174 = vld [vmem:[#allocation5 + $0x100] sm:$0xff]
    %v175 = vld [vmem:[#allocation5 + $0x108] sm:$0xff]
    %v176 = vld [vmem:[#allocation5 + $0x110] sm:$0xff]
    %v177 = vld [vmem:[#allocation5 + $0x118] sm:$0xff]
    %v178 = vld [vmem:[#allocation5 + $0x120] sm:$0xff]
    %v179 = vld [vmem:[#allocation5 + $0x128] sm:$0xff]
    %v180 = vld [vmem:[#allocation5 + $0x130] sm:$0xff]
    %v181 = vld [vmem:[#allocation5 + $0x138] sm:$0xff]
    %v182 = vld [vmem:[#allocation5 + $0x140] sm:$0xff]
    %v183 = vld [vmem:[#allocation5 + $0x148] sm:$0xff]
    %v184 = vld [vmem:[#allocation5 + $0x150] sm:$0xff]
    %v185 = vld [vmem:[#allocation5 + $0x158] sm:$0xff]
    %v186 = vld [vmem:[#allocation5 + $0x160] sm:$0xff]
    %v187 = vld [vmem:[#allocation5 + $0x168] sm:$0xff]
    %v188 = vld [vmem:[#allocation5 + $0x170] sm:$0xff]
    %v189 = vld [vmem:[#allocation5 + $0x178] sm:$0xff]
    %v190 = vld [vmem:[#allocation7 + $0x1] sm:$0x1]
    %v191 = vlaneseq
    %v192 = vshrl.u32 %v191, 7
    %v193 = vsub.s32 0, %v192
    %v194 = vrot.slane %v190, %v193
    %195 = vmatprep.subr.mxu0 0.0
    %196 = vmatpush1.msra.mxu0 %v189
    %197 = vmatprep.subr.mxu0 0.0
    %198 = vmatpush1.msra.mxu0 %v188
    %199 = vmatprep.subr.mxu0 0.0
    %200 = vmatpush1.msra.mxu0 %v187
    %201 = vmatprep.subr.mxu0 0.0
    %202 = vmatpush1.msra.mxu0 %v186
    %203 = vmatprep.subr.mxu0 0.0
    %204 = vmatpush1.msra.mxu0 %v185
    %205 = vmatprep.subr.mxu0 0.0
    %206 = vmatpush1.msra.mxu0 %v184
    %207 = vmatprep.subr.mxu0 0.0
    %208 = vmatpush1.msra.mxu0 %v183
    %209 = vmatprep.subr.mxu0 0.0
    %210 = vmatpush1.msra.mxu0 %v182
    %211 = vmatprep.subr.mxu0 0.0
    %212 = vmatpush1.msra.mxu0 %v181
    %213 = vmatprep.subr.mxu0 0.0
    %214 = vmatpush1.msra.mxu0 %v180
    %215 = vmatprep.subr.mxu0 0.0
    %216 = vmatpush1.msra.mxu0 %v179
    %217 = vmatprep.subr.mxu0 0.0
    %218 = vmatpush1.msra.mxu0 %v178
    %219 = vmatprep.subr.mxu0 0.0
    %220 = vmatpush1.msra.mxu0 %v177
    %221 = vmatprep.subr.mxu0 0.0
    %222 = vmatpush1.msra.mxu0 %v176
    %223 = vmatprep.subr.mxu0 0.0
    %224 = vmatpush1.msra.mxu0 %v175
    %225 = vmatprep.subr.mxu0 0.0
    %226 = vmatpush1.msra.mxu0 %v174
    %227 = vmatprep.subr.mxu0 0.0
    %228 = vmatpush2.msra.mxu0 0.0
    %229 = vmatprep.subr.mxu0 0.0
    %230 = vmatpush2.msra.mxu0 0.0
    %231 = vmatprep.subr.mxu0 0.0
    %232 = vmatpush2.msra.mxu0 0.0
    %233 = vmatprep.subr.mxu0 0.0
    %234 = vmatpush2.msra.mxu0 0.0
    %235 = vmatprep.subr.mxu0 0.0
    %236 = vmatpush2.msra.mxu0 0.0
    %237 = vmatprep.subr.mxu0 0.0
    %238 = vmatpush2.msra.mxu0 0.0
    %239 = vmatprep.subr.mxu0 0.0
    %240 = vmatpush2.msra.mxu0 0.0
    %241 = vmatprep.subr.mxu0 0.0
    %242 = vmatpush2.msra.mxu0 0.0
    %243 = vmatprep.subr.mxu0 0.0
    %244 = vmatpush2.msra.mxu0 0.0
    %245 = vmatprep.subr.mxu0 0.0
    %246 = vmatpush2.msra.mxu0 0.0
    %247 = vmatprep.subr.mxu0 0.0
    %248 = vmatpush2.msra.mxu0 0.0
    %249 = vmatprep.subr.mxu0 0.0
    %250 = vmatpush2.msra.mxu0 0.0
    %251 = vmatprep.subr.mxu0 0.0
    %252 = vmatpush2.msra.mxu0 0.0
    %253 = vmatprep.subr.mxu0 0.0
    %254 = vmatpush2.msra.mxu0 0.0
    %255 = vmatprep.subr.mxu0 0.0
    %256 = vmatpush2.msra.mxu0 0.0
    %257 = vmatprep.subr.mxu0 0.0
    %258 = vmatpush2.msra.mxu0 0.0
    %259 = vmatprep.mubr.f32.mxu0 0.0
    %260 = vmatmul.mubr.f32.gmra.mxu0 %v172
    %v261 = vpop.f32.mrf.mxu0
    %v262 = vadd.f32 %v194, %v261
    %v263 = vpop.f32.mrf.mxu0
    %264 = vmatprep.mubr.f32.mxu0 0.0
    %265 = vmatmul.mubr.f32.gmra.mxu0 %v173
    %v266 = vpop.f32.mrf.mxu0
    %v267 = vadd.f32 %v194, %v266
    %v268 = vpop.f32.mrf.mxu0
    %269 = vdwg.mxu0
    %v270 = vmax.f32 %v262, 0.0
    %v271 = vmax.f32 %v267, 0.0
    %v272 = vld [vmem:[#allocation5 + $0x180] sm:$0xff]
    %v273 = vld [vmem:[#allocation5 + $0x188] sm:$0xff]
    %v274 = vld [vmem:[#allocation5 + $0x190] sm:$0xff]
    %v275 = vld [vmem:[#allocation5 + $0x198] sm:$0xff]
    %v276 = vld [vmem:[#allocation5 + $0x1a0] sm:$0xff]
    %v277 = vld [vmem:[#allocation5 + $0x1a8] sm:$0xff]
    %v278 = vld [vmem:[#allocation5 + $0x1b0] sm:$0xff]
    %v279 = vld [vmem:[#allocation5 + $0x1b8] sm:$0xff]
    %v280 = vld [vmem:[#allocation5 + $0x1c0] sm:$0xff]
    %v281 = vld [vmem:[#allocation5 + $0x1c8] sm:$0xff]
    %v282 = vld [vmem:[#allocation5 + $0x1d0] sm:$0xff]
    %v283 = vld [vmem:[#allocation5 + $0x1d8] sm:$0xff]
    %v284 = vld [vmem:[#allocation5 + $0x1e0] sm:$0xff]
    %v285 = vld [vmem:[#allocation5 + $0x1e8] sm:$0xff]
    %v286 = vld [vmem:[#allocation5 + $0x1f0] sm:$0xff]
    %v287 = vld [vmem:[#allocation5 + $0x1f8] sm:$0xff]
    %v288 = vld [vmem:[#allocation7 + $0x2] sm:$0x1]
    %v289 = vlaneseq
    %v290 = vshrl.u32 %v289, 7
    %v291 = vsub.s32 0, %v290
    %v292 = vrot.slane %v288, %v291
    %293 = vmatprep.subr.mxu0 0.0
    %294 = vmatpush1.msra.mxu0 %v287
    %295 = vmatprep.subr.mxu0 0.0
    %296 = vmatpush1.msra.mxu0 %v286
    %297 = vmatprep.subr.mxu0 0.0
    %298 = vmatpush1.msra.mxu0 %v285
    %299 = vmatprep.subr.mxu0 0.0
    %300 = vmatpush1.msra.mxu0 %v284
    %301 = vmatprep.subr.mxu0 0.0
    %302 = vmatpush1.msra.mxu0 %v283
    %303 = vmatprep.subr.mxu0 0.0
    %304 = vmatpush1.msra.mxu0 %v282
    %305 = vmatprep.subr.mxu0 0.0
    %306 = vmatpush1.msra.mxu0 %v281
    %307 = vmatprep.subr.mxu0 0.0
    %308 = vmatpush1.msra.mxu0 %v280
    %309 = vmatprep.subr.mxu0 0.0
    %310 = vmatpush1.msra.mxu0 %v279
    %311 = vmatprep.subr.mxu0 0.0
    %312 = vmatpush1.msra.mxu0 %v278
    %313 = vmatprep.subr.mxu0 0.0
    %314 = vmatpush1.msra.mxu0 %v277
    %315 = vmatprep.subr.mxu0 0.0
    %316 = vmatpush1.msra.mxu0 %v276
    %317 = vmatprep.subr.mxu0 0.0
    %318 = vmatpush1.msra.mxu0 %v275
    %319 = vmatprep.subr.mxu0 0.0
    %320 = vmatpush1.msra.mxu0 %v274
    %321 = vmatprep.subr.mxu0 0.0
    %322 = vmatpush1.msra.mxu0 %v273
    %323 = vmatprep.subr.mxu0 0.0
    %324 = vmatpush1.msra.mxu0 %v272
    %325 = vmatprep.subr.mxu0 0.0
    %326 = vmatpush2.msra.mxu0 0.0
    %327 = vmatprep.subr.mxu0 0.0
    %328 = vmatpush2.msra.mxu0 0.0
    %329 = vmatprep.subr.mxu0 0.0
    %330 = vmatpush2.msra.mxu0 0.0
    %331 = vmatprep.subr.mxu0 0.0
    %332 = vmatpush2.msra.mxu0 0.0
    %333 = vmatprep.subr.mxu0 0.0
    %334 = vmatpush2.msra.mxu0 0.0
    %335 = vmatprep.subr.mxu0 0.0
    %336 = vmatpush2.msra.mxu0 0.0
    %337 = vmatprep.subr.mxu0 0.0
    %338 = vmatpush2.msra.mxu0 0.0
    %339 = vmatprep.subr.mxu0 0.0
    %340 = vmatpush2.msra.mxu0 0.0
    %341 = vmatprep.subr.mxu0 0.0
    %342 = vmatpush2.msra.mxu0 0.0
    %343 = vmatprep.subr.mxu0 0.0
    %344 = vmatpush2.msra.mxu0 0.0
    %345 = vmatprep.subr.mxu0 0.0
    %346 = vmatpush2.msra.mxu0 0.0
    %347 = vmatprep.subr.mxu0 0.0
    %348 = vmatpush2.msra.mxu0 0.0
    %349 = vmatprep.subr.mxu0 0.0
    %350 = vmatpush2.msra.mxu0 0.0
    %351 = vmatprep.subr.mxu0 0.0
    %352 = vmatpush2.msra.mxu0 0.0
    %353 = vmatprep.subr.mxu0 0.0
    %354 = vmatpush2.msra.mxu0 0.0
    %355 = vmatprep.subr.mxu0 0.0
    %356 = vmatpush2.msra.mxu0 0.0
    %357 = vmatprep.mubr.f32.mxu0 0.0
    %358 = vmatmul.mubr.f32.gmra.mxu0 %v270
    %v359 = vpop.f32.mrf.mxu0
    %v360 = vadd.f32 %v292, %v359
    %v361 = vpop.f32.mrf.mxu0
    %362 = vmatprep.mubr.f32.mxu0 0.0
    %363 = vmatmul.mubr.f32.gmra.mxu0 %v271
    %v364 = vpop.f32.mrf.mxu0
    %v365 = vadd.f32 %v292, %v364
    %v366 = vpop.f32.mrf.mxu0
    %367 = vdwg.mxu0
    %v368 = vmax.f32 %v360, 0.0
    %v369 = vmax.f32 %v365, 0.0
    %v370 = vld [vmem:[#allocation5 + $0x200] sm:$0xff]
    %v371 = vld [vmem:[#allocation5 + $0x208] sm:$0xff]
    %v372 = vld [vmem:[#allocation5 + $0x210] sm:$0xff]
    %v373 = vld [vmem:[#allocation5 + $0x218] sm:$0xff]
    %v374 = vld [vmem:[#allocation5 + $0x220] sm:$0xff]
    %v375 = vld [vmem:[#allocation5 + $0x228] sm:$0xff]
    %v376 = vld [vmem:[#allocation5 + $0x230] sm:$0xff]
    %v377 = vld [vmem:[#allocation5 + $0x238] sm:$0xff]
    %v378 = vld [vmem:[#allocation5 + $0x240] sm:$0xff]
    %v379 = vld [vmem:[#allocation5 + $0x248] sm:$0xff]
    %v380 = vld [vmem:[#allocation5 + $0x250] sm:$0xff]
    %v381 = vld [vmem:[#allocation5 + $0x258] sm:$0xff]
    %v382 = vld [vmem:[#allocation5 + $0x260] sm:$0xff]
    %v383 = vld [vmem:[#allocation5 + $0x268] sm:$0xff]
    %v384 = vld [vmem:[#allocation5 + $0x270] sm:$0xff]
    %v385 = vld [vmem:[#allocation5 + $0x278] sm:$0xff]
    %v386 = vld [vmem:[#allocation7 + $0x3] sm:$0x1]
    %v387 = vlaneseq
    %v388 = vshrl.u32 %v387, 7
    %v389 = vsub.s32 0, %v388
    %v390 = vrot.slane %v386, %v389
    %391 = vmatprep.subr.mxu0 0.0
    %392 = vmatpush1.msra.mxu0 %v385
    %393 = vmatprep.subr.mxu0 0.0
    %394 = vmatpush1.msra.mxu0 %v384
    %395 = vmatprep.subr.mxu0 0.0
    %396 = vmatpush1.msra.mxu0 %v383
    %397 = vmatprep.subr.mxu0 0.0
    %398 = vmatpush1.msra.mxu0 %v382
    %399 = vmatprep.subr.mxu0 0.0
    %400 = vmatpush1.msra.mxu0 %v381
    %401 = vmatprep.subr.mxu0 0.0
    %402 = vmatpush1.msra.mxu0 %v380
    %403 = vmatprep.subr.mxu0 0.0
    %404 = vmatpush1.msra.mxu0 %v379
    %405 = vmatprep.subr.mxu0 0.0
    %406 = vmatpush1.msra.mxu0 %v378
    %407 = vmatprep.subr.mxu0 0.0
    %408 = vmatpush1.msra.mxu0 %v377
    %409 = vmatprep.subr.mxu0 0.0
    %410 = vmatpush1.msra.mxu0 %v376
    %411 = vmatprep.subr.mxu0 0.0
    %412 = vmatpush1.msra.mxu0 %v375
    %413 = vmatprep.subr.mxu0 0.0
    %414 = vmatpush1.msra.mxu0 %v374
    %415 = vmatprep.subr.mxu0 0.0
    %416 = vmatpush1.msra.mxu0 %v373
    %417 = vmatprep.subr.mxu0 0.0
    %418 = vmatpush1.msra.mxu0 %v372
    %419 = vmatprep.subr.mxu0 0.0
    %420 = vmatpush1.msra.mxu0 %v371
    %421 = vmatprep.subr.mxu0 0.0
    %422 = vmatpush1.msra.mxu0 %v370
    %423 = vmatprep.subr.mxu0 0.0
    %424 = vmatpush2.msra.mxu0 0.0
    %425 = vmatprep.subr.mxu0 0.0
    %426 = vmatpush2.msra.mxu0 0.0
    %427 = vmatprep.subr.mxu0 0.0
    %428 = vmatpush2.msra.mxu0 0.0
    %429 = vmatprep.subr.mxu0 0.0
    %430 = vmatpush2.msra.mxu0 0.0
    %431 = vmatprep.subr.mxu0 0.0
    %432 = vmatpush2.msra.mxu0 0.0
    %433 = vmatprep.subr.mxu0 0.0
    %434 = vmatpush2.msra.mxu0 0.0
    %435 = vmatprep.subr.mxu0 0.0
    %436 = vmatpush2.msra.mxu0 0.0
    %437 = vmatprep.subr.mxu0 0.0
    %438 = vmatpush2.msra.mxu0 0.0
    %439 = vmatprep.subr.mxu0 0.0
    %440 = vmatpush2.msra.mxu0 0.0
    %441 = vmatprep.subr.mxu0 0.0
    %442 = vmatpush2.msra.mxu0 0.0
    %443 = vmatprep.subr.mxu0 0.0
    %444 = vmatpush2.msra.mxu0 0.0
    %445 = vmatprep.subr.mxu0 0.0
    %446 = vmatpush2.msra.mxu0 0.0
    %447 = vmatprep.subr.mxu0 0.0
    %448 = vmatpush2.msra.mxu0 0.0
    %449 = vmatprep.subr.mxu0 0.0
    %450 = vmatpush2.msra.mxu0 0.0
    %451 = vmatprep.subr.mxu0 0.0
    %452 = vmatpush2.msra.mxu0 0.0
    %453 = vmatprep.subr.mxu0 0.0
    %454 = vmatpush2.msra.mxu0 0.0
    %455 = vmatprep.mubr.f32.mxu0 0.0
    %456 = vmatmul.mubr.f32.gmra.mxu0 %v368
    %v457 = vpop.f32.mrf.mxu0
    %v458 = vadd.f32 %v390, %v457
    %v459 = vpop.f32.mrf.mxu0
    %460 = vmatprep.mubr.f32.mxu0 0.0
    %461 = vmatmul.mubr.f32.gmra.mxu0 %v369
    %v462 = vpop.f32.mrf.mxu0
    %v463 = vadd.f32 %v390, %v462
    %v464 = vpop.f32.mrf.mxu0
    %465 = vdwg.mxu0
    %v466 = vmax.f32 %v458, 0.0
    %v467 = vmax.f32 %v463, 0.0
    %v468 = vld [vmem:[#allocation5 + $0x280] sm:$0xff]
    %v469 = vld [vmem:[#allocation5 + $0x288] sm:$0xff]
    %v470 = vld [vmem:[#allocation5 + $0x290] sm:$0xff]
    %v471 = vld [vmem:[#allocation5 + $0x298] sm:$0xff]
    %v472 = vld [vmem:[#allocation5 + $0x2a0] sm:$0xff]
    %v473 = vld [vmem:[#allocation5 + $0x2a8] sm:$0xff]
    %v474 = vld [vmem:[#allocation5 + $0x2b0] sm:$0xff]
    %v475 = vld [vmem:[#allocation5 + $0x2b8] sm:$0xff]
    %v476 = vld [vmem:[#allocation5 + $0x2c0] sm:$0xff]
    %v477 = vld [vmem:[#allocation5 + $0x2c8] sm:$0xff]
    %v478 = vld [vmem:[#allocation5 + $0x2d0] sm:$0xff]
    %v479 = vld [vmem:[#allocation5 + $0x2d8] sm:$0xff]
    %v480 = vld [vmem:[#allocation5 + $0x2e0] sm:$0xff]
    %v481 = vld [vmem:[#allocation5 + $0x2e8] sm:$0xff]
    %v482 = vld [vmem:[#allocation5 + $0x2f0] sm:$0xff]
    %v483 = vld [vmem:[#allocation5 + $0x2f8] sm:$0xff]
    %v484 = vld [vmem:[#allocation7 + $0x4] sm:$0x1]
    %v485 = vlaneseq
    %v486 = vshrl.u32 %v485, 7
    %v487 = vsub.s32 0, %v486
    %v488 = vrot.slane %v484, %v487
    %489 = vmatprep.subr.mxu0 0.0
    %490 = vmatpush1.msra.mxu0 %v483
    %491 = vmatprep.subr.mxu0 0.0
    %492 = vmatpush1.msra.mxu0 %v482
    %493 = vmatprep.subr.mxu0 0.0
    %494 = vmatpush1.msra.mxu0 %v481
    %495 = vmatprep.subr.mxu0 0.0
    %496 = vmatpush1.msra.mxu0 %v480
    %497 = vmatprep.subr.mxu0 0.0
    %498 = vmatpush1.msra.mxu0 %v479
    %499 = vmatprep.subr.mxu0 0.0
    %500 = vmatpush1.msra.mxu0 %v478
    %501 = vmatprep.subr.mxu0 0.0
    %502 = vmatpush1.msra.mxu0 %v477
    %503 = vmatprep.subr.mxu0 0.0
    %504 = vmatpush1.msra.mxu0 %v476
    %505 = vmatprep.subr.mxu0 0.0
    %506 = vmatpush1.msra.mxu0 %v475
    %507 = vmatprep.subr.mxu0 0.0
    %508 = vmatpush1.msra.mxu0 %v474
    %509 = vmatprep.subr.mxu0 0.0
    %510 = vmatpush1.msra.mxu0 %v473
    %511 = vmatprep.subr.mxu0 0.0
    %512 = vmatpush1.msra.mxu0 %v472
    %513 = vmatprep.subr.mxu0 0.0
    %514 = vmatpush1.msra.mxu0 %v471
    %515 = vmatprep.subr.mxu0 0.0
    %516 = vmatpush1.msra.mxu0 %v470
    %517 = vmatprep.subr.mxu0 0.0
    %518 = vmatpush1.msra.mxu0 %v469
    %519 = vmatprep.subr.mxu0 0.0
    %520 = vmatpush1.msra.mxu0 %v468
    %521 = vmatprep.subr.mxu0 0.0
    %522 = vmatpush2.msra.mxu0 0.0
    %523 = vmatprep.subr.mxu0 0.0
    %524 = vmatpush2.msra.mxu0 0.0
    %525 = vmatprep.subr.mxu0 0.0
    %526 = vmatpush2.msra.mxu0 0.0
    %527 = vmatprep.subr.mxu0 0.0
    %528 = vmatpush2.msra.mxu0 0.0
    %529 = vmatprep.subr.mxu0 0.0
    %530 = vmatpush2.msra.mxu0 0.0
    %531 = vmatprep.subr.mxu0 0.0
    %532 = vmatpush2.msra.mxu0 0.0
    %533 = vmatprep.subr.mxu0 0.0
    %534 = vmatpush2.msra.mxu0 0.0
    %535 = vmatprep.subr.mxu0 0.0
    %536 = vmatpush2.msra.mxu0 0.0
    %537 = vmatprep.subr.mxu0 0.0
    %538 = vmatpush2.msra.mxu0 0.0
    %539 = vmatprep.subr.mxu0 0.0
    %540 = vmatpush2.msra.mxu0 0.0
    %541 = vmatprep.subr.mxu0 0.0
    %542 = vmatpush2.msra.mxu0 0.0
    %543 = vmatprep.subr.mxu0 0.0
    %544 = vmatpush2.msra.mxu0 0.0
    %545 = vmatprep.subr.mxu0 0.0
    %546 = vmatpush2.msra.mxu0 0.0
    %547 = vmatprep.subr.mxu0 0.0
    %548 = vmatpush2.msra.mxu0 0.0
    %549 = vmatprep.subr.mxu0 0.0
    %550 = vmatpush2.msra.mxu0 0.0
    %551 = vmatprep.subr.mxu0 0.0
    %552 = vmatpush2.msra.mxu0 0.0
    %553 = vmatprep.mubr.f32.mxu0 0.0
    %554 = vmatmul.mubr.f32.gmra.mxu0 %v466
    %v555 = vpop.f32.mrf.mxu0
    %v556 = vadd.f32 %v488, %v555
    %v557 = vpop.f32.mrf.mxu0
    %558 = vmatprep.mubr.f32.mxu0 0.0
    %559 = vmatmul.mubr.f32.gmra.mxu0 %v467
    %v560 = vpop.f32.mrf.mxu0
    %v561 = vadd.f32 %v488, %v560
    %v562 = vpop.f32.mrf.mxu0
    %563 = vdwg.mxu0
    %v564 = vmax.f32 %v556, 0.0
    %v565 = vmax.f32 %v561, 0.0
    %v566 = vld [vmem:[#allocation5 + $0x300] sm:$0xff]
    %v567 = vld [vmem:[#allocation5 + $0x308] sm:$0xff]
    %v568 = vld [vmem:[#allocation5 + $0x310] sm:$0xff]
    %v569 = vld [vmem:[#allocation5 + $0x318] sm:$0xff]
    %v570 = vld [vmem:[#allocation5 + $0x320] sm:$0xff]
    %v571 = vld [vmem:[#allocation5 + $0x328] sm:$0xff]
    %v572 = vld [vmem:[#allocation5 + $0x330] sm:$0xff]
    %v573 = vld [vmem:[#allocation5 + $0x338] sm:$0xff]
    %v574 = vld [vmem:[#allocation5 + $0x340] sm:$0xff]
    %v575 = vld [vmem:[#allocation5 + $0x348] sm:$0xff]
    %v576 = vld [vmem:[#allocation5 + $0x350] sm:$0xff]
    %v577 = vld [vmem:[#allocation5 + $0x358] sm:$0xff]
    %v578 = vld [vmem:[#allocation5 + $0x360] sm:$0xff]
    %v579 = vld [vmem:[#allocation5 + $0x368] sm:$0xff]
    %v580 = vld [vmem:[#allocation5 + $0x370] sm:$0xff]
    %v581 = vld [vmem:[#allocation5 + $0x378] sm:$0xff]
    %v582 = vld [vmem:[#allocation7 + $0x5] sm:$0x1]
    %v583 = vlaneseq
    %v584 = vshrl.u32 %v583, 7
    %v585 = vsub.s32 0, %v584
    %v586 = vrot.slane %v582, %v585
    %587 = vmatprep.subr.mxu0 0.0
    %588 = vmatpush1.msra.mxu0 %v581
    %589 = vmatprep.subr.mxu0 0.0
    %590 = vmatpush1.msra.mxu0 %v580
    %591 = vmatprep.subr.mxu0 0.0
    %592 = vmatpush1.msra.mxu0 %v579
    %593 = vmatprep.subr.mxu0 0.0
    %594 = vmatpush1.msra.mxu0 %v578
    %595 = vmatprep.subr.mxu0 0.0
    %596 = vmatpush1.msra.mxu0 %v577
    %597 = vmatprep.subr.mxu0 0.0
    %598 = vmatpush1.msra.mxu0 %v576
    %599 = vmatprep.subr.mxu0 0.0
    %600 = vmatpush1.msra.mxu0 %v575
    %601 = vmatprep.subr.mxu0 0.0
    %602 = vmatpush1.msra.mxu0 %v574
    %603 = vmatprep.subr.mxu0 0.0
    %604 = vmatpush1.msra.mxu0 %v573
    %605 = vmatprep.subr.mxu0 0.0
    %606 = vmatpush1.msra.mxu0 %v572
    %607 = vmatprep.subr.mxu0 0.0
    %608 = vmatpush1.msra.mxu0 %v571
    %609 = vmatprep.subr.mxu0 0.0
    %610 = vmatpush1.msra.mxu0 %v570
    %611 = vmatprep.subr.mxu0 0.0
    %612 = vmatpush1.msra.mxu0 %v569
    %613 = vmatprep.subr.mxu0 0.0
    %614 = vmatpush1.msra.mxu0 %v568
    %615 = vmatprep.subr.mxu0 0.0
    %616 = vmatpush1.msra.mxu0 %v567
    %617 = vmatprep.subr.mxu0 0.0
    %618 = vmatpush1.msra.mxu0 %v566
    %619 = vmatprep.subr.mxu0 0.0
    %620 = vmatpush2.msra.mxu0 0.0
    %621 = vmatprep.subr.mxu0 0.0
    %622 = vmatpush2.msra.mxu0 0.0
    %623 = vmatprep.subr.mxu0 0.0
    %624 = vmatpush2.msra.mxu0 0.0
    %625 = vmatprep.subr.mxu0 0.0
    %626 = vmatpush2.msra.mxu0 0.0
    %627 = vmatprep.subr.mxu0 0.0
    %628 = vmatpush2.msra.mxu0 0.0
    %629 = vmatprep.subr.mxu0 0.0
    %630 = vmatpush2.msra.mxu0 0.0
    %631 = vmatprep.subr.mxu0 0.0
    %632 = vmatpush2.msra.mxu0 0.0
    %633 = vmatprep.subr.mxu0 0.0
    %634 = vmatpush2.msra.mxu0 0.0
    %635 = vmatprep.subr.mxu0 0.0
    %636 = vmatpush2.msra.mxu0 0.0
    %637 = vmatprep.subr.mxu0 0.0
    %638 = vmatpush2.msra.mxu0 0.0
    %639 = vmatprep.subr.mxu0 0.0
    %640 = vmatpush2.msra.mxu0 0.0
    %641 = vmatprep.subr.mxu0 0.0
    %642 = vmatpush2.msra.mxu0 0.0
    %643 = vmatprep.subr.mxu0 0.0
    %644 = vmatpush2.msra.mxu0 0.0
    %645 = vmatprep.subr.mxu0 0.0
    %646 = vmatpush2.msra.mxu0 0.0
    %647 = vmatprep.subr.mxu0 0.0
    %648 = vmatpush2.msra.mxu0 0.0
    %649 = vmatprep.subr.mxu0 0.0
    %650 = vmatpush2.msra.mxu0 0.0
    %651 = vmatprep.mubr.f32.mxu0 0.0
    %652 = vmatmul.mubr.f32.gmra.mxu0 %v564
    %v653 = vpop.f32.mrf.mxu0
    %v654 = vadd.f32 %v586, %v653
    %v655 = vpop.f32.mrf.mxu0
    %656 = vmatprep.mubr.f32.mxu0 0.0
    %657 = vmatmul.mubr.f32.gmra.mxu0 %v565
    %v658 = vpop.f32.mrf.mxu0
    %v659 = vadd.f32 %v586, %v658
    %v660 = vpop.f32.mrf.mxu0
    %661 = vdwg.mxu0
    %v662 = vmax.f32 %v654, 0.0
    %v663 = vmax.f32 %v659, 0.0
    %v664 = vld [vmem:[#allocation5 + $0x380] sm:$0xff]
    %v665 = vld [vmem:[#allocation5 + $0x388] sm:$0xff]
    %v666 = vld [vmem:[#allocation5 + $0x390] sm:$0xff]
    %v667 = vld [vmem:[#allocation5 + $0x398] sm:$0xff]
    %v668 = vld [vmem:[#allocation5 + $0x3a0] sm:$0xff]
    %v669 = vld [vmem:[#allocation5 + $0x3a8] sm:$0xff]
    %v670 = vld [vmem:[#allocation5 + $0x3b0] sm:$0xff]
    %v671 = vld [vmem:[#allocation5 + $0x3b8] sm:$0xff]
    %v672 = vld [vmem:[#allocation5 + $0x3c0] sm:$0xff]
    %v673 = vld [vmem:[#allocation5 + $0x3c8] sm:$0xff]
    %v674 = vld [vmem:[#allocation5 + $0x3d0] sm:$0xff]
    %v675 = vld [vmem:[#allocation5 + $0x3d8] sm:$0xff]
    %v676 = vld [vmem:[#allocation5 + $0x3e0] sm:$0xff]
    %v677 = vld [vmem:[#allocation5 + $0x3e8] sm:$0xff]
    %v678 = vld [vmem:[#allocation5 + $0x3f0] sm:$0xff]
    %v679 = vld [vmem:[#allocation5 + $0x3f8] sm:$0xff]
    %v680 = vld [vmem:[#allocation7 + $0x6] sm:$0x1]
    %v681 = vlaneseq
    %v682 = vshrl.u32 %v681, 7
    %v683 = vsub.s32 0, %v682
    %v684 = vrot.slane %v680, %v683
    %685 = vmatprep.subr.mxu0 0.0
    %686 = vmatpush1.msra.mxu0 %v679
    %687 = vmatprep.subr.mxu0 0.0
    %688 = vmatpush1.msra.mxu0 %v678
    %689 = vmatprep.subr.mxu0 0.0
    %690 = vmatpush1.msra.mxu0 %v677
    %691 = vmatprep.subr.mxu0 0.0
    %692 = vmatpush1.msra.mxu0 %v676
    %693 = vmatprep.subr.mxu0 0.0
    %694 = vmatpush1.msra.mxu0 %v675
    %695 = vmatprep.subr.mxu0 0.0
    %696 = vmatpush1.msra.mxu0 %v674
    %697 = vmatprep.subr.mxu0 0.0
    %698 = vmatpush1.msra.mxu0 %v673
    %699 = vmatprep.subr.mxu0 0.0
    %700 = vmatpush1.msra.mxu0 %v672
    %701 = vmatprep.subr.mxu0 0.0
    %702 = vmatpush1.msra.mxu0 %v671
    %703 = vmatprep.subr.mxu0 0.0
    %704 = vmatpush1.msra.mxu0 %v670
    %705 = vmatprep.subr.mxu0 0.0
    %706 = vmatpush1.msra.mxu0 %v669
    %707 = vmatprep.subr.mxu0 0.0
    %708 = vmatpush1.msra.mxu0 %v668
    %709 = vmatprep.subr.mxu0 0.0
    %710 = vmatpush1.msra.mxu0 %v667
    %711 = vmatprep.subr.mxu0 0.0
    %712 = vmatpush1.msra.mxu0 %v666
    %713 = vmatprep.subr.mxu0 0.0
    %714 = vmatpush1.msra.mxu0 %v665
    %715 = vmatprep.subr.mxu0 0.0
    %716 = vmatpush1.msra.mxu0 %v664
    %717 = vmatprep.subr.mxu0 0.0
    %718 = vmatpush2.msra.mxu0 0.0
    %719 = vmatprep.subr.mxu0 0.0
    %720 = vmatpush2.msra.mxu0 0.0
    %721 = vmatprep.subr.mxu0 0.0
    %722 = vmatpush2.msra.mxu0 0.0
    %723 = vmatprep.subr.mxu0 0.0
    %724 = vmatpush2.msra.mxu0 0.0
    %725 = vmatprep.subr.mxu0 0.0
    %726 = vmatpush2.msra.mxu0 0.0
    %727 = vmatprep.subr.mxu0 0.0
    %728 = vmatpush2.msra.mxu0 0.0
    %729 = vmatprep.subr.mxu0 0.0
    %730 = vmatpush2.msra.mxu0 0.0
    %731 = vmatprep.subr.mxu0 0.0
    %732 = vmatpush2.msra.mxu0 0.0
    %733 = vmatprep.subr.mxu0 0.0
    %734 = vmatpush2.msra.mxu0 0.0
    %735 = vmatprep.subr.mxu0 0.0
    %736 = vmatpush2.msra.mxu0 0.0
    %737 = vmatprep.subr.mxu0 0.0
    %738 = vmatpush2.msra.mxu0 0.0
    %739 = vmatprep.subr.mxu0 0.0
    %740 = vmatpush2.msra.mxu0 0.0
    %741 = vmatprep.subr.mxu0 0.0
    %742 = vmatpush2.msra.mxu0 0.0
    %743 = vmatprep.subr.mxu0 0.0
    %744 = vmatpush2.msra.mxu0 0.0
    %745 = vmatprep.subr.mxu0 0.0
    %746 = vmatpush2.msra.mxu0 0.0
    %747 = vmatprep.subr.mxu0 0.0
    %748 = vmatpush2.msra.mxu0 0.0
    %749 = vmatprep.mubr.f32.mxu0 0.0
    %750 = vmatmul.mubr.f32.gmra.mxu0 %v662
    %v751 = vpop.f32.mrf.mxu0
    %v752 = vadd.f32 %v684, %v751
    %v753 = vpop.f32.mrf.mxu0
    %754 = vmatprep.mubr.f32.mxu0 0.0
    %755 = vmatmul.mubr.f32.gmra.mxu0 %v663
    %v756 = vpop.f32.mrf.mxu0
    %v757 = vadd.f32 %v684, %v756
    %v758 = vpop.f32.mrf.mxu0
    %759 = vdwg.mxu0
    %v760 = vmax.f32 %v752, 0.0
    %v761 = vmax.f32 %v757, 0.0
    %v762 = vld [vmem:[#allocation5 + $0x400] sm:$0xff]
    %v763 = vld [vmem:[#allocation5 + $0x408] sm:$0xff]
    %v764 = vld [vmem:[#allocation5 + $0x410] sm:$0xff]
    %v765 = vld [vmem:[#allocation5 + $0x418] sm:$0xff]
    %v766 = vld [vmem:[#allocation5 + $0x420] sm:$0xff]
    %v767 = vld [vmem:[#allocation5 + $0x428] sm:$0xff]
    %v768 = vld [vmem:[#allocation5 + $0x430] sm:$0xff]
    %v769 = vld [vmem:[#allocation5 + $0x438] sm:$0xff]
    %v770 = vld [vmem:[#allocation5 + $0x440] sm:$0xff]
    %v771 = vld [vmem:[#allocation5 + $0x448] sm:$0xff]
    %v772 = vld [vmem:[#allocation5 + $0x450] sm:$0xff]
    %v773 = vld [vmem:[#allocation5 + $0x458] sm:$0xff]
    %v774 = vld [vmem:[#allocation5 + $0x460] sm:$0xff]
    %v775 = vld [vmem:[#allocation5 + $0x468] sm:$0xff]
    %v776 = vld [vmem:[#allocation5 + $0x470] sm:$0xff]
    %v777 = vld [vmem:[#allocation5 + $0x478] sm:$0xff]
    %v778 = vld [vmem:[#allocation7 + $0x7] sm:$0x1]
    %v779 = vlaneseq
    %v780 = vshrl.u32 %v779, 7
    %v781 = vsub.s32 0, %v780
    %v782 = vrot.slane %v778, %v781
    %783 = vmatprep.subr.mxu0 0.0
    %784 = vmatpush1.msra.mxu0 %v777
    %785 = vmatprep.subr.mxu0 0.0
    %786 = vmatpush1.msra.mxu0 %v776
    %787 = vmatprep.subr.mxu0 0.0
    %788 = vmatpush1.msra.mxu0 %v775
    %789 = vmatprep.subr.mxu0 0.0
    %790 = vmatpush1.msra.mxu0 %v774
    %791 = vmatprep.subr.mxu0 0.0
    %792 = vmatpush1.msra.mxu0 %v773
    %793 = vmatprep.subr.mxu0 0.0
    %794 = vmatpush1.msra.mxu0 %v772
    %795 = vmatprep.subr.mxu0 0.0
    %796 = vmatpush1.msra.mxu0 %v771
    %797 = vmatprep.subr.mxu0 0.0
    %798 = vmatpush1.msra.mxu0 %v770
    %799 = vmatprep.subr.mxu0 0.0
    %800 = vmatpush1.msra.mxu0 %v769
    %801 = vmatprep.subr.mxu0 0.0
    %802 = vmatpush1.msra.mxu0 %v768
    %803 = vmatprep.subr.mxu0 0.0
    %804 = vmatpush1.msra.mxu0 %v767
    %805 = vmatprep.subr.mxu0 0.0
    %806 = vmatpush1.msra.mxu0 %v766
    %807 = vmatprep.subr.mxu0 0.0
    %808 = vmatpush1.msra.mxu0 %v765
    %809 = vmatprep.subr.mxu0 0.0
    %810 = vmatpush1.msra.mxu0 %v764
    %811 = vmatprep.subr.mxu0 0.0
    %812 = vmatpush1.msra.mxu0 %v763
    %813 = vmatprep.subr.mxu0 0.0
    %814 = vmatpush1.msra.mxu0 %v762
    %815 = vmatprep.subr.mxu0 0.0
    %816 = vmatpush2.msra.mxu0 0.0
    %817 = vmatprep.subr.mxu0 0.0
    %818 = vmatpush2.msra.mxu0 0.0
    %819 = vmatprep.subr.mxu0 0.0
    %820 = vmatpush2.msra.mxu0 0.0
    %821 = vmatprep.subr.mxu0 0.0
    %822 = vmatpush2.msra.mxu0 0.0
    %823 = vmatprep.subr.mxu0 0.0
    %824 = vmatpush2.msra.mxu0 0.0
    %825 = vmatprep.subr.mxu0 0.0
    %826 = vmatpush2.msra.mxu0 0.0
    %827 = vmatprep.subr.mxu0 0.0
    %828 = vmatpush2.msra.mxu0 0.0
    %829 = vmatprep.subr.mxu0 0.0
    %830 = vmatpush2.msra.mxu0 0.0
    %831 = vmatprep.subr.mxu0 0.0
    %832 = vmatpush2.msra.mxu0 0.0
    %833 = vmatprep.subr.mxu0 0.0
    %834 = vmatpush2.msra.mxu0 0.0
    %835 = vmatprep.subr.mxu0 0.0
    %836 = vmatpush2.msra.mxu0 0.0
    %837 = vmatprep.subr.mxu0 0.0
    %838 = vmatpush2.msra.mxu0 0.0
    %839 = vmatprep.subr.mxu0 0.0
    %840 = vmatpush2.msra.mxu0 0.0
    %841 = vmatprep.subr.mxu0 0.0
    %842 = vmatpush2.msra.mxu0 0.0
    %843 = vmatprep.subr.mxu0 0.0
    %844 = vmatpush2.msra.mxu0 0.0
    %845 = vmatprep.subr.mxu0 0.0
    %846 = vmatpush2.msra.mxu0 0.0
    %847 = vmatprep.mubr.f32.mxu0 0.0
    %848 = vmatmul.mubr.f32.gmra.mxu0 %v760
    %v849 = vpop.f32.mrf.mxu0
    %v850 = vadd.f32 %v782, %v849
    %v851 = vpop.f32.mrf.mxu0
    %852 = vmatprep.mubr.f32.mxu0 0.0
    %853 = vmatmul.mubr.f32.gmra.mxu0 %v761
    %v854 = vpop.f32.mrf.mxu0
    %v855 = vadd.f32 %v782, %v854
    %v856 = vpop.f32.mrf.mxu0
    %857 = vdwg.mxu0
    %v858 = vmax.f32 %v850, 0.0
    %v859 = vmax.f32 %v855, 0.0
    %v860 = vld [vmem:[#allocation5 + $0x480] sm:$0xff]
    %v861 = vld [vmem:[#allocation5 + $0x488] sm:$0xff]
    %v862 = vld [vmem:[#allocation5 + $0x490] sm:$0xff]
    %v863 = vld [vmem:[#allocation5 + $0x498] sm:$0xff]
    %v864 = vld [vmem:[#allocation5 + $0x4a0] sm:$0xff]
    %v865 = vld [vmem:[#allocation5 + $0x4a8] sm:$0xff]
    %v866 = vld [vmem:[#allocation5 + $0x4b0] sm:$0xff]
    %v867 = vld [vmem:[#allocation5 + $0x4b8] sm:$0xff]
    %v868 = vld [vmem:[#allocation5 + $0x4c0] sm:$0xff]
    %v869 = vld [vmem:[#allocation5 + $0x4c8] sm:$0xff]
    %v870 = vld [vmem:[#allocation5 + $0x4d0] sm:$0xff]
    %v871 = vld [vmem:[#allocation5 + $0x4d8] sm:$0xff]
    %v872 = vld [vmem:[#allocation5 + $0x4e0] sm:$0xff]
    %v873 = vld [vmem:[#allocation5 + $0x4e8] sm:$0xff]
    %v874 = vld [vmem:[#allocation5 + $0x4f0] sm:$0xff]
    %v875 = vld [vmem:[#allocation5 + $0x4f8] sm:$0xff]
    %v876 = vld [vmem:[#allocation7 + $0x8] sm:$0x1]
    %v877 = vlaneseq
    %v878 = vshrl.u32 %v877, 7
    %v879 = vsub.s32 0, %v878
    %v880 = vrot.slane %v876, %v879
    %881 = vmatprep.subr.mxu0 0.0
    %882 = vmatpush1.msra.mxu0 %v875
    %883 = vmatprep.subr.mxu0 0.0
    %884 = vmatpush1.msra.mxu0 %v874
    %885 = vmatprep.subr.mxu0 0.0
    %886 = vmatpush1.msra.mxu0 %v873
    %887 = vmatprep.subr.mxu0 0.0
    %888 = vmatpush1.msra.mxu0 %v872
    %889 = vmatprep.subr.mxu0 0.0
    %890 = vmatpush1.msra.mxu0 %v871
    %891 = vmatprep.subr.mxu0 0.0
    %892 = vmatpush1.msra.mxu0 %v870
    %893 = vmatprep.subr.mxu0 0.0
    %894 = vmatpush1.msra.mxu0 %v869
    %895 = vmatprep.subr.mxu0 0.0
    %896 = vmatpush1.msra.mxu0 %v868
    %897 = vmatprep.subr.mxu0 0.0
    %898 = vmatpush1.msra.mxu0 %v867
    %899 = vmatprep.subr.mxu0 0.0
    %900 = vmatpush1.msra.mxu0 %v866
    %901 = vmatprep.subr.mxu0 0.0
    %902 = vmatpush1.msra.mxu0 %v865
    %903 = vmatprep.subr.mxu0 0.0
    %904 = vmatpush1.msra.mxu0 %v864
    %905 = vmatprep.subr.mxu0 0.0
    %906 = vmatpush1.msra.mxu0 %v863
    %907 = vmatprep.subr.mxu0 0.0
    %908 = vmatpush1.msra.mxu0 %v862
    %909 = vmatprep.subr.mxu0 0.0
    %910 = vmatpush1.msra.mxu0 %v861
    %911 = vmatprep.subr.mxu0 0.0
    %912 = vmatpush1.msra.mxu0 %v860
    %913 = vmatprep.subr.mxu0 0.0
    %914 = vmatpush2.msra.mxu0 0.0
    %915 = vmatprep.subr.mxu0 0.0
    %916 = vmatpush2.msra.mxu0 0.0
    %917 = vmatprep.subr.mxu0 0.0
    %918 = vmatpush2.msra.mxu0 0.0
    %919 = vmatprep.subr.mxu0 0.0
    %920 = vmatpush2.msra.mxu0 0.0
    %921 = vmatprep.subr.mxu0 0.0
    %922 = vmatpush2.msra.mxu0 0.0
    %923 = vmatprep.subr.mxu0 0.0
    %924 = vmatpush2.msra.mxu0 0.0
    %925 = vmatprep.subr.mxu0 0.0
    %926 = vmatpush2.msra.mxu0 0.0
    %927 = vmatprep.subr.mxu0 0.0
    %928 = vmatpush2.msra.mxu0 0.0
    %929 = vmatprep.subr.mxu0 0.0
    %930 = vmatpush2.msra.mxu0 0.0
    %931 = vmatprep.subr.mxu0 0.0
    %932 = vmatpush2.msra.mxu0 0.0
    %933 = vmatprep.subr.mxu0 0.0
    %934 = vmatpush2.msra.mxu0 0.0
    %935 = vmatprep.subr.mxu0 0.0
    %936 = vmatpush2.msra.mxu0 0.0
    %937 = vmatprep.subr.mxu0 0.0
    %938 = vmatpush2.msra.mxu0 0.0
    %939 = vmatprep.subr.mxu0 0.0
    %940 = vmatpush2.msra.mxu0 0.0
    %941 = vmatprep.subr.mxu0 0.0
    %942 = vmatpush2.msra.mxu0 0.0
    %943 = vmatprep.subr.mxu0 0.0
    %944 = vmatpush2.msra.mxu0 0.0
    %945 = vmatprep.mubr.f32.mxu0 0.0
    %946 = vmatmul.mubr.f32.gmra.mxu0 %v858
    %v947 = vpop.f32.mrf.mxu0
    %v948 = vadd.f32 %v880, %v947
    %v949 = vpop.f32.mrf.mxu0
    %950 = vmatprep.mubr.f32.mxu0 0.0
    %951 = vmatmul.mubr.f32.gmra.mxu0 %v859
    %v952 = vpop.f32.mrf.mxu0
    %v953 = vadd.f32 %v880, %v952
    %v954 = vpop.f32.mrf.mxu0
    %955 = vdwg.mxu0
    %v956 = vmax.f32 %v948, 0.0
    %v957 = vmax.f32 %v953, 0.0
    %v958 = vld [vmem:[#allocation5 + $0x500] sm:$0xff]
    %v959 = vld [vmem:[#allocation5 + $0x508] sm:$0xff]
    %v960 = vld [vmem:[#allocation5 + $0x510] sm:$0xff]
    %v961 = vld [vmem:[#allocation5 + $0x518] sm:$0xff]
    %v962 = vld [vmem:[#allocation5 + $0x520] sm:$0xff]
    %v963 = vld [vmem:[#allocation5 + $0x528] sm:$0xff]
    %v964 = vld [vmem:[#allocation5 + $0x530] sm:$0xff]
    %v965 = vld [vmem:[#allocation5 + $0x538] sm:$0xff]
    %v966 = vld [vmem:[#allocation5 + $0x540] sm:$0xff]
    %v967 = vld [vmem:[#allocation5 + $0x548] sm:$0xff]
    %v968 = vld [vmem:[#allocation5 + $0x550] sm:$0xff]
    %v969 = vld [vmem:[#allocation5 + $0x558] sm:$0xff]
    %v970 = vld [vmem:[#allocation5 + $0x560] sm:$0xff]
    %v971 = vld [vmem:[#allocation5 + $0x568] sm:$0xff]
    %v972 = vld [vmem:[#allocation5 + $0x570] sm:$0xff]
    %v973 = vld [vmem:[#allocation5 + $0x578] sm:$0xff]
    %v974 = vld [vmem:[#allocation7 + $0x9] sm:$0x1]
    %v975 = vlaneseq
    %v976 = vshrl.u32 %v975, 7
    %v977 = vsub.s32 0, %v976
    %v978 = vrot.slane %v974, %v977
    %979 = vmatprep.subr.mxu0 0.0
    %980 = vmatpush1.msra.mxu0 %v973
    %981 = vmatprep.subr.mxu0 0.0
    %982 = vmatpush1.msra.mxu0 %v972
    %983 = vmatprep.subr.mxu0 0.0
    %984 = vmatpush1.msra.mxu0 %v971
    %985 = vmatprep.subr.mxu0 0.0
    %986 = vmatpush1.msra.mxu0 %v970
    %987 = vmatprep.subr.mxu0 0.0
    %988 = vmatpush1.msra.mxu0 %v969
    %989 = vmatprep.subr.mxu0 0.0
    %990 = vmatpush1.msra.mxu0 %v968
    %991 = vmatprep.subr.mxu0 0.0
    %992 = vmatpush1.msra.mxu0 %v967
    %993 = vmatprep.subr.mxu0 0.0
    %994 = vmatpush1.msra.mxu0 %v966
    %995 = vmatprep.subr.mxu0 0.0
    %996 = vmatpush1.msra.mxu0 %v965
    %997 = vmatprep.subr.mxu0 0.0
    %998 = vmatpush1.msra.mxu0 %v964
    %999 = vmatprep.subr.mxu0 0.0
    %1000 = vmatpush1.msra.mxu0 %v963
    %1001 = vmatprep.subr.mxu0 0.0
    %1002 = vmatpush1.msra.mxu0 %v962
    %1003 = vmatprep.subr.mxu0 0.0
    %1004 = vmatpush1.msra.mxu0 %v961
    %1005 = vmatprep.subr.mxu0 0.0
    %1006 = vmatpush1.msra.mxu0 %v960
    %1007 = vmatprep.subr.mxu0 0.0
    %1008 = vmatpush1.msra.mxu0 %v959
    %1009 = vmatprep.subr.mxu0 0.0
    %1010 = vmatpush1.msra.mxu0 %v958
    %1011 = vmatprep.subr.mxu0 0.0
    %1012 = vmatpush2.msra.mxu0 0.0
    %1013 = vmatprep.subr.mxu0 0.0
    %1014 = vmatpush2.msra.mxu0 0.0
    %1015 = vmatprep.subr.mxu0 0.0
    %1016 = vmatpush2.msra.mxu0 0.0
    %1017 = vmatprep.subr.mxu0 0.0
    %1018 = vmatpush2.msra.mxu0 0.0
    %1019 = vmatprep.subr.mxu0 0.0
    %1020 = vmatpush2.msra.mxu0 0.0
    %1021 = vmatprep.subr.mxu0 0.0
    %1022 = vmatpush2.msra.mxu0 0.0
    %1023 = vmatprep.subr.mxu0 0.0
    %1024 = vmatpush2.msra.mxu0 0.0
    %1025 = vmatprep.subr.mxu0 0.0
    %1026 = vmatpush2.msra.mxu0 0.0
    %1027 = vmatprep.subr.mxu0 0.0
    %1028 = vmatpush2.msra.mxu0 0.0
    %1029 = vmatprep.subr.mxu0 0.0
    %1030 = vmatpush2.msra.mxu0 0.0
    %1031 = vmatprep.subr.mxu0 0.0
    %1032 = vmatpush2.msra.mxu0 0.0
    %1033 = vmatprep.subr.mxu0 0.0
    %1034 = vmatpush2.msra.mxu0 0.0
    %1035 = vmatprep.subr.mxu0 0.0
    %1036 = vmatpush2.msra.mxu0 0.0
    %1037 = vmatprep.subr.mxu0 0.0
    %1038 = vmatpush2.msra.mxu0 0.0
    %1039 = vmatprep.subr.mxu0 0.0
    %1040 = vmatpush2.msra.mxu0 0.0
    %1041 = vmatprep.subr.mxu0 0.0
    %1042 = vmatpush2.msra.mxu0 0.0
    %1043 = vmatprep.mubr.f32.mxu0 0.0
    %1044 = vmatmul.mubr.f32.gmra.mxu0 %v956
    %v1045 = vpop.f32.mrf.mxu0
    %v1046 = vadd.f32 %v978, %v1045
    %v1047 = vpop.f32.mrf.mxu0
    %1048 = vmatprep.mubr.f32.mxu0 0.0
    %1049 = vmatmul.mubr.f32.gmra.mxu0 %v957
    %v1050 = vpop.f32.mrf.mxu0
    %v1051 = vadd.f32 %v978, %v1050
    %v1052 = vpop.f32.mrf.mxu0
    %1053 = vdwg.mxu0
    %v1054 = vmax.f32 %v1046, 0.0
    %v1055 = vmax.f32 %v1051, 0.0
    %v1056 = vld [vmem:[#allocation5 + $0x580] sm:$0xff]
    %v1057 = vld [vmem:[#allocation5 + $0x588] sm:$0xff]
    %v1058 = vld [vmem:[#allocation5 + $0x590] sm:$0xff]
    %v1059 = vld [vmem:[#allocation5 + $0x598] sm:$0xff]
    %v1060 = vld [vmem:[#allocation5 + $0x5a0] sm:$0xff]
    %v1061 = vld [vmem:[#allocation5 + $0x5a8] sm:$0xff]
    %v1062 = vld [vmem:[#allocation5 + $0x5b0] sm:$0xff]
    %v1063 = vld [vmem:[#allocation5 + $0x5b8] sm:$0xff]
    %v1064 = vld [vmem:[#allocation5 + $0x5c0] sm:$0xff]
    %v1065 = vld [vmem:[#allocation5 + $0x5c8] sm:$0xff]
    %v1066 = vld [vmem:[#allocation5 + $0x5d0] sm:$0xff]
    %v1067 = vld [vmem:[#allocation5 + $0x5d8] sm:$0xff]
    %v1068 = vld [vmem:[#allocation5 + $0x5e0] sm:$0xff]
    %v1069 = vld [vmem:[#allocation5 + $0x5e8] sm:$0xff]
    %v1070 = vld [vmem:[#allocation5 + $0x5f0] sm:$0xff]
    %v1071 = vld [vmem:[#allocation5 + $0x5f8] sm:$0xff]
    %v1072 = vld [vmem:[#allocation7 + $0xa] sm:$0x1]
    %v1073 = vlaneseq
    %v1074 = vshrl.u32 %v1073, 7
    %v1075 = vsub.s32 0, %v1074
    %v1076 = vrot.slane %v1072, %v1075
    %1077 = vmatprep.subr.mxu0 0.0
    %1078 = vmatpush1.msra.mxu0 %v1071
    %1079 = vmatprep.subr.mxu0 0.0
    %1080 = vmatpush1.msra.mxu0 %v1070
    %1081 = vmatprep.subr.mxu0 0.0
    %1082 = vmatpush1.msra.mxu0 %v1069
    %1083 = vmatprep.subr.mxu0 0.0
    %1084 = vmatpush1.msra.mxu0 %v1068
    %1085 = vmatprep.subr.mxu0 0.0
    %1086 = vmatpush1.msra.mxu0 %v1067
    %1087 = vmatprep.subr.mxu0 0.0
    %1088 = vmatpush1.msra.mxu0 %v1066
    %1089 = vmatprep.subr.mxu0 0.0
    %1090 = vmatpush1.msra.mxu0 %v1065
    %1091 = vmatprep.subr.mxu0 0.0
    %1092 = vmatpush1.msra.mxu0 %v1064
    %1093 = vmatprep.subr.mxu0 0.0
    %1094 = vmatpush1.msra.mxu0 %v1063
    %1095 = vmatprep.subr.mxu0 0.0
    %1096 = vmatpush1.msra.mxu0 %v1062
    %1097 = vmatprep.subr.mxu0 0.0
    %1098 = vmatpush1.msra.mxu0 %v1061
    %1099 = vmatprep.subr.mxu0 0.0
    %1100 = vmatpush1.msra.mxu0 %v1060
    %1101 = vmatprep.subr.mxu0 0.0
    %1102 = vmatpush1.msra.mxu0 %v1059
    %1103 = vmatprep.subr.mxu0 0.0
    %1104 = vmatpush1.msra.mxu0 %v1058
    %1105 = vmatprep.subr.mxu0 0.0
    %1106 = vmatpush1.msra.mxu0 %v1057
    %1107 = vmatprep.subr.mxu0 0.0
    %1108 = vmatpush1.msra.mxu0 %v1056
    %1109 = vmatprep.subr.mxu0 0.0
    %1110 = vmatpush2.msra.mxu0 0.0
    %1111 = vmatprep.subr.mxu0 0.0
    %1112 = vmatpush2.msra.mxu0 0.0
    %1113 = vmatprep.subr.mxu0 0.0
    %1114 = vmatpush2.msra.mxu0 0.0
    %1115 = vmatprep.subr.mxu0 0.0
    %1116 = vmatpush2.msra.mxu0 0.0
    %1117 = vmatprep.subr.mxu0 0.0
    %1118 = vmatpush2.msra.mxu0 0.0
    %1119 = vmatprep.subr.mxu0 0.0
    %1120 = vmatpush2.msra.mxu0 0.0
    %1121 = vmatprep.subr.mxu0 0.0
    %1122 = vmatpush2.msra.mxu0 0.0
    %1123 = vmatprep.subr.mxu0 0.0
    %1124 = vmatpush2.msra.mxu0 0.0
    %1125 = vmatprep.subr.mxu0 0.0
    %1126 = vmatpush2.msra.mxu0 0.0
    %1127 = vmatprep.subr.mxu0 0.0
    %1128 = vmatpush2.msra.mxu0 0.0
    %1129 = vmatprep.subr.mxu0 0.0
    %1130 = vmatpush2.msra.mxu0 0.0
    %1131 = vmatprep.subr.mxu0 0.0
    %1132 = vmatpush2.msra.mxu0 0.0
    %1133 = vmatprep.subr.mxu0 0.0
    %1134 = vmatpush2.msra.mxu0 0.0
    %1135 = vmatprep.subr.mxu0 0.0
    %1136 = vmatpush2.msra.mxu0 0.0
    %1137 = vmatprep.subr.mxu0 0.0
    %1138 = vmatpush2.msra.mxu0 0.0
    %1139 = vmatprep.subr.mxu0 0.0
    %1140 = vmatpush2.msra.mxu0 0.0
    %1141 = vmatprep.mubr.f32.mxu0 0.0
    %1142 = vmatmul.mubr.f32.gmra.mxu0 %v1054
    %v1143 = vpop.f32.mrf.mxu0
    %v1144 = vadd.f32 %v1076, %v1143
    %v1145 = vpop.f32.mrf.mxu0
    %1146 = vmatprep.mubr.f32.mxu0 0.0
    %1147 = vmatmul.mubr.f32.gmra.mxu0 %v1055
    %v1148 = vpop.f32.mrf.mxu0
    %v1149 = vadd.f32 %v1076, %v1148
    %v1150 = vpop.f32.mrf.mxu0
    %1151 = vdwg.mxu0
    %v1152 = vmax.f32 %v1144, 0.0
    %v1153 = vmax.f32 %v1149, 0.0
    %v1154 = vld [vmem:[#allocation5 + $0x600] sm:$0xff]
    %v1155 = vld [vmem:[#allocation5 + $0x608] sm:$0xff]
    %v1156 = vld [vmem:[#allocation5 + $0x610] sm:$0xff]
    %v1157 = vld [vmem:[#allocation5 + $0x618] sm:$0xff]
    %v1158 = vld [vmem:[#allocation5 + $0x620] sm:$0xff]
    %v1159 = vld [vmem:[#allocation5 + $0x628] sm:$0xff]
    %v1160 = vld [vmem:[#allocation5 + $0x630] sm:$0xff]
    %v1161 = vld [vmem:[#allocation5 + $0x638] sm:$0xff]
    %v1162 = vld [vmem:[#allocation5 + $0x640] sm:$0xff]
    %v1163 = vld [vmem:[#allocation5 + $0x648] sm:$0xff]
    %v1164 = vld [vmem:[#allocation5 + $0x650] sm:$0xff]
    %v1165 = vld [vmem:[#allocation5 + $0x658] sm:$0xff]
    %v1166 = vld [vmem:[#allocation5 + $0x660] sm:$0xff]
    %v1167 = vld [vmem:[#allocation5 + $0x668] sm:$0xff]
    %v1168 = vld [vmem:[#allocation5 + $0x670] sm:$0xff]
    %v1169 = vld [vmem:[#allocation5 + $0x678] sm:$0xff]
    %v1170 = vld [vmem:[#allocation7 + $0xb] sm:$0x1]
    %v1171 = vlaneseq
    %v1172 = vshrl.u32 %v1171, 7
    %v1173 = vsub.s32 0, %v1172
    %v1174 = vrot.slane %v1170, %v1173
    %1175 = vmatprep.subr.mxu0 0.0
    %1176 = vmatpush1.msra.mxu0 %v1169
    %1177 = vmatprep.subr.mxu0 0.0
    %1178 = vmatpush1.msra.mxu0 %v1168
    %1179 = vmatprep.subr.mxu0 0.0
    %1180 = vmatpush1.msra.mxu0 %v1167
    %1181 = vmatprep.subr.mxu0 0.0
    %1182 = vmatpush1.msra.mxu0 %v1166
    %1183 = vmatprep.subr.mxu0 0.0
    %1184 = vmatpush1.msra.mxu0 %v1165
    %1185 = vmatprep.subr.mxu0 0.0
    %1186 = vmatpush1.msra.mxu0 %v1164
    %1187 = vmatprep.subr.mxu0 0.0
    %1188 = vmatpush1.msra.mxu0 %v1163
    %1189 = vmatprep.subr.mxu0 0.0
    %1190 = vmatpush1.msra.mxu0 %v1162
    %1191 = vmatprep.subr.mxu0 0.0
    %1192 = vmatpush1.msra.mxu0 %v1161
    %1193 = vmatprep.subr.mxu0 0.0
    %1194 = vmatpush1.msra.mxu0 %v1160
    %1195 = vmatprep.subr.mxu0 0.0
    %1196 = vmatpush1.msra.mxu0 %v1159
    %1197 = vmatprep.subr.mxu0 0.0
    %1198 = vmatpush1.msra.mxu0 %v1158
    %1199 = vmatprep.subr.mxu0 0.0
    %1200 = vmatpush1.msra.mxu0 %v1157
    %1201 = vmatprep.subr.mxu0 0.0
    %1202 = vmatpush1.msra.mxu0 %v1156
    %1203 = vmatprep.subr.mxu0 0.0
    %1204 = vmatpush1.msra.mxu0 %v1155
    %1205 = vmatprep.subr.mxu0 0.0
    %1206 = vmatpush1.msra.mxu0 %v1154
    %1207 = vmatprep.subr.mxu0 0.0
    %1208 = vmatpush2.msra.mxu0 0.0
    %1209 = vmatprep.subr.mxu0 0.0
    %1210 = vmatpush2.msra.mxu0 0.0
    %1211 = vmatprep.subr.mxu0 0.0
    %1212 = vmatpush2.msra.mxu0 0.0
    %1213 = vmatprep.subr.mxu0 0.0
    %1214 = vmatpush2.msra.mxu0 0.0
    %1215 = vmatprep.subr.mxu0 0.0
    %1216 = vmatpush2.msra.mxu0 0.0
    %1217 = vmatprep.subr.mxu0 0.0
    %1218 = vmatpush2.msra.mxu0 0.0
    %1219 = vmatprep.subr.mxu0 0.0
    %1220 = vmatpush2.msra.mxu0 0.0
    %1221 = vmatprep.subr.mxu0 0.0
    %1222 = vmatpush2.msra.mxu0 0.0
    %1223 = vmatprep.subr.mxu0 0.0
    %1224 = vmatpush2.msra.mxu0 0.0
    %1225 = vmatprep.subr.mxu0 0.0
    %1226 = vmatpush2.msra.mxu0 0.0
    %1227 = vmatprep.subr.mxu0 0.0
    %1228 = vmatpush2.msra.mxu0 0.0
    %1229 = vmatprep.subr.mxu0 0.0
    %1230 = vmatpush2.msra.mxu0 0.0
    %1231 = vmatprep.subr.mxu0 0.0
    %1232 = vmatpush2.msra.mxu0 0.0
    %1233 = vmatprep.subr.mxu0 0.0
    %1234 = vmatpush2.msra.mxu0 0.0
    %1235 = vmatprep.subr.mxu0 0.0
    %1236 = vmatpush2.msra.mxu0 0.0
    %1237 = vmatprep.subr.mxu0 0.0
    %1238 = vmatpush2.msra.mxu0 0.0
    %1239 = vmatprep.mubr.f32.mxu0 0.0
    %1240 = vmatmul.mubr.f32.gmra.mxu0 %v1152
    %v1241 = vpop.f32.mrf.mxu0
    %v1242 = vadd.f32 %v1174, %v1241
    %v1243 = vpop.f32.mrf.mxu0
    %1244 = vmatprep.mubr.f32.mxu0 0.0
    %1245 = vmatmul.mubr.f32.gmra.mxu0 %v1153
    %v1246 = vpop.f32.mrf.mxu0
    %v1247 = vadd.f32 %v1174, %v1246
    %v1248 = vpop.f32.mrf.mxu0
    %1249 = vdwg.mxu0
    %v1250 = vmax.f32 %v1242, 0.0
    %v1251 = vmax.f32 %v1247, 0.0
    %v1252 = vld [vmem:[#allocation5 + $0x680] sm:$0xff]
    %v1253 = vld [vmem:[#allocation5 + $0x688] sm:$0xff]
    %v1254 = vld [vmem:[#allocation5 + $0x690] sm:$0xff]
    %v1255 = vld [vmem:[#allocation5 + $0x698] sm:$0xff]
    %v1256 = vld [vmem:[#allocation5 + $0x6a0] sm:$0xff]
    %v1257 = vld [vmem:[#allocation5 + $0x6a8] sm:$0xff]
    %v1258 = vld [vmem:[#allocation5 + $0x6b0] sm:$0xff]
    %v1259 = vld [vmem:[#allocation5 + $0x6b8] sm:$0xff]
    %v1260 = vld [vmem:[#allocation5 + $0x6c0] sm:$0xff]
    %v1261 = vld [vmem:[#allocation5 + $0x6c8] sm:$0xff]
    %v1262 = vld [vmem:[#allocation5 + $0x6d0] sm:$0xff]
    %v1263 = vld [vmem:[#allocation5 + $0x6d8] sm:$0xff]
    %v1264 = vld [vmem:[#allocation5 + $0x6e0] sm:$0xff]
    %v1265 = vld [vmem:[#allocation5 + $0x6e8] sm:$0xff]
    %v1266 = vld [vmem:[#allocation5 + $0x6f0] sm:$0xff]
    %v1267 = vld [vmem:[#allocation5 + $0x6f8] sm:$0xff]
    %v1268 = vld [vmem:[#allocation7 + $0xc] sm:$0x1]
    %v1269 = vlaneseq
    %v1270 = vshrl.u32 %v1269, 7
    %v1271 = vsub.s32 0, %v1270
    %v1272 = vrot.slane %v1268, %v1271
    %1273 = vmatprep.subr.mxu0 0.0
    %1274 = vmatpush1.msra.mxu0 %v1267
    %1275 = vmatprep.subr.mxu0 0.0
    %1276 = vmatpush1.msra.mxu0 %v1266
    %1277 = vmatprep.subr.mxu0 0.0
    %1278 = vmatpush1.msra.mxu0 %v1265
    %1279 = vmatprep.subr.mxu0 0.0
    %1280 = vmatpush1.msra.mxu0 %v1264
    %1281 = vmatprep.subr.mxu0 0.0
    %1282 = vmatpush1.msra.mxu0 %v1263
    %1283 = vmatprep.subr.mxu0 0.0
    %1284 = vmatpush1.msra.mxu0 %v1262
    %1285 = vmatprep.subr.mxu0 0.0
    %1286 = vmatpush1.msra.mxu0 %v1261
    %1287 = vmatprep.subr.mxu0 0.0
    %1288 = vmatpush1.msra.mxu0 %v1260
    %1289 = vmatprep.subr.mxu0 0.0
    %1290 = vmatpush1.msra.mxu0 %v1259
    %1291 = vmatprep.subr.mxu0 0.0
    %1292 = vmatpush1.msra.mxu0 %v1258
    %1293 = vmatprep.subr.mxu0 0.0
    %1294 = vmatpush1.msra.mxu0 %v1257
    %1295 = vmatprep.subr.mxu0 0.0
    %1296 = vmatpush1.msra.mxu0 %v1256
    %1297 = vmatprep.subr.mxu0 0.0
    %1298 = vmatpush1.msra.mxu0 %v1255
    %1299 = vmatprep.subr.mxu0 0.0
    %1300 = vmatpush1.msra.mxu0 %v1254
    %1301 = vmatprep.subr.mxu0 0.0
    %1302 = vmatpush1.msra.mxu0 %v1253
    %1303 = vmatprep.subr.mxu0 0.0
    %1304 = vmatpush1.msra.mxu0 %v1252
    %1305 = vmatprep.subr.mxu0 0.0
    %1306 = vmatpush2.msra.mxu0 0.0
    %1307 = vmatprep.subr.mxu0 0.0
    %1308 = vmatpush2.msra.mxu0 0.0
    %1309 = vmatprep.subr.mxu0 0.0
    %1310 = vmatpush2.msra.mxu0 0.0
    %1311 = vmatprep.subr.mxu0 0.0
    %1312 = vmatpush2.msra.mxu0 0.0
    %1313 = vmatprep.subr.mxu0 0.0
    %1314 = vmatpush2.msra.mxu0 0.0
    %1315 = vmatprep.subr.mxu0 0.0
    %1316 = vmatpush2.msra.mxu0 0.0
    %1317 = vmatprep.subr.mxu0 0.0
    %1318 = vmatpush2.msra.mxu0 0.0
    %1319 = vmatprep.subr.mxu0 0.0
    %1320 = vmatpush2.msra.mxu0 0.0
    %1321 = vmatprep.subr.mxu0 0.0
    %1322 = vmatpush2.msra.mxu0 0.0
    %1323 = vmatprep.subr.mxu0 0.0
    %1324 = vmatpush2.msra.mxu0 0.0
    %1325 = vmatprep.subr.mxu0 0.0
    %1326 = vmatpush2.msra.mxu0 0.0
    %1327 = vmatprep.subr.mxu0 0.0
    %1328 = vmatpush2.msra.mxu0 0.0
    %1329 = vmatprep.subr.mxu0 0.0
    %1330 = vmatpush2.msra.mxu0 0.0
    %1331 = vmatprep.subr.mxu0 0.0
    %1332 = vmatpush2.msra.mxu0 0.0
    %1333 = vmatprep.subr.mxu0 0.0
    %1334 = vmatpush2.msra.mxu0 0.0
    %1335 = vmatprep.subr.mxu0 0.0
    %1336 = vmatpush2.msra.mxu0 0.0
    %1337 = vmatprep.mubr.f32.mxu0 0.0
    %1338 = vmatmul.mubr.f32.gmra.mxu0 %v1250
    %v1339 = vpop.f32.mrf.mxu0
    %v1340 = vadd.f32 %v1272, %v1339
    %v1341 = vpop.f32.mrf.mxu0
    %1342 = vmatprep.mubr.f32.mxu0 0.0
    %1343 = vmatmul.mubr.f32.gmra.mxu0 %v1251
    %v1344 = vpop.f32.mrf.mxu0
    %v1345 = vadd.f32 %v1272, %v1344
    %v1346 = vpop.f32.mrf.mxu0
    %1347 = vdwg.mxu0
    %v1348 = vmax.f32 %v1340, 0.0
    %v1349 = vmax.f32 %v1345, 0.0
    %v1350 = vld [vmem:[#allocation5 + $0x700] sm:$0xff]
    %v1351 = vld [vmem:[#allocation5 + $0x708] sm:$0xff]
    %v1352 = vld [vmem:[#allocation5 + $0x710] sm:$0xff]
    %v1353 = vld [vmem:[#allocation5 + $0x718] sm:$0xff]
    %v1354 = vld [vmem:[#allocation5 + $0x720] sm:$0xff]
    %v1355 = vld [vmem:[#allocation5 + $0x728] sm:$0xff]
    %v1356 = vld [vmem:[#allocation5 + $0x730] sm:$0xff]
    %v1357 = vld [vmem:[#allocation5 + $0x738] sm:$0xff]
    %v1358 = vld [vmem:[#allocation5 + $0x740] sm:$0xff]
    %v1359 = vld [vmem:[#allocation5 + $0x748] sm:$0xff]
    %v1360 = vld [vmem:[#allocation5 + $0x750] sm:$0xff]
    %v1361 = vld [vmem:[#allocation5 + $0x758] sm:$0xff]
    %v1362 = vld [vmem:[#allocation5 + $0x760] sm:$0xff]
    %v1363 = vld [vmem:[#allocation5 + $0x768] sm:$0xff]
    %v1364 = vld [vmem:[#allocation5 + $0x770] sm:$0xff]
    %v1365 = vld [vmem:[#allocation5 + $0x778] sm:$0xff]
    %v1366 = vld [vmem:[#allocation7 + $0xd] sm:$0x1]
    %v1367 = vlaneseq
    %v1368 = vshrl.u32 %v1367, 7
    %v1369 = vsub.s32 0, %v1368
    %v1370 = vrot.slane %v1366, %v1369
    %1371 = vmatprep.subr.mxu0 0.0
    %1372 = vmatpush1.msra.mxu0 %v1365
    %1373 = vmatprep.subr.mxu0 0.0
    %1374 = vmatpush1.msra.mxu0 %v1364
    %1375 = vmatprep.subr.mxu0 0.0
    %1376 = vmatpush1.msra.mxu0 %v1363
    %1377 = vmatprep.subr.mxu0 0.0
    %1378 = vmatpush1.msra.mxu0 %v1362
    %1379 = vmatprep.subr.mxu0 0.0
    %1380 = vmatpush1.msra.mxu0 %v1361
    %1381 = vmatprep.subr.mxu0 0.0
    %1382 = vmatpush1.msra.mxu0 %v1360
    %1383 = vmatprep.subr.mxu0 0.0
    %1384 = vmatpush1.msra.mxu0 %v1359
    %1385 = vmatprep.subr.mxu0 0.0
    %1386 = vmatpush1.msra.mxu0 %v1358
    %1387 = vmatprep.subr.mxu0 0.0
    %1388 = vmatpush1.msra.mxu0 %v1357
    %1389 = vmatprep.subr.mxu0 0.0
    %1390 = vmatpush1.msra.mxu0 %v1356
    %1391 = vmatprep.subr.mxu0 0.0
    %1392 = vmatpush1.msra.mxu0 %v1355
    %1393 = vmatprep.subr.mxu0 0.0
    %1394 = vmatpush1.msra.mxu0 %v1354
    %1395 = vmatprep.subr.mxu0 0.0
    %1396 = vmatpush1.msra.mxu0 %v1353
    %1397 = vmatprep.subr.mxu0 0.0
    %1398 = vmatpush1.msra.mxu0 %v1352
    %1399 = vmatprep.subr.mxu0 0.0
    %1400 = vmatpush1.msra.mxu0 %v1351
    %1401 = vmatprep.subr.mxu0 0.0
    %1402 = vmatpush1.msra.mxu0 %v1350
    %1403 = vmatprep.subr.mxu0 0.0
    %1404 = vmatpush2.msra.mxu0 0.0
    %1405 = vmatprep.subr.mxu0 0.0
    %1406 = vmatpush2.msra.mxu0 0.0
    %1407 = vmatprep.subr.mxu0 0.0
    %1408 = vmatpush2.msra.mxu0 0.0
    %1409 = vmatprep.subr.mxu0 0.0
    %1410 = vmatpush2.msra.mxu0 0.0
    %1411 = vmatprep.subr.mxu0 0.0
    %1412 = vmatpush2.msra.mxu0 0.0
    %1413 = vmatprep.subr.mxu0 0.0
    %1414 = vmatpush2.msra.mxu0 0.0
    %1415 = vmatprep.subr.mxu0 0.0
    %1416 = vmatpush2.msra.mxu0 0.0
    %1417 = vmatprep.subr.mxu0 0.0
    %1418 = vmatpush2.msra.mxu0 0.0
    %1419 = vmatprep.subr.mxu0 0.0
    %1420 = vmatpush2.msra.mxu0 0.0
    %1421 = vmatprep.subr.mxu0 0.0
    %1422 = vmatpush2.msra.mxu0 0.0
    %1423 = vmatprep.subr.mxu0 0.0
    %1424 = vmatpush2.msra.mxu0 0.0
    %1425 = vmatprep.subr.mxu0 0.0
    %1426 = vmatpush2.msra.mxu0 0.0
    %1427 = vmatprep.subr.mxu0 0.0
    %1428 = vmatpush2.msra.mxu0 0.0
    %1429 = vmatprep.subr.mxu0 0.0
    %1430 = vmatpush2.msra.mxu0 0.0
    %1431 = vmatprep.subr.mxu0 0.0
    %1432 = vmatpush2.msra.mxu0 0.0
    %1433 = vmatprep.subr.mxu0 0.0
    %1434 = vmatpush2.msra.mxu0 0.0
    %1435 = vmatprep.mubr.f32.mxu0 0.0
    %1436 = vmatmul.mubr.f32.gmra.mxu0 %v1348
    %v1437 = vpop.f32.mrf.mxu0
    %v1438 = vadd.f32 %v1370, %v1437
    %v1439 = vpop.f32.mrf.mxu0
    %1440 = vmatprep.mubr.f32.mxu0 0.0
    %1441 = vmatmul.mubr.f32.gmra.mxu0 %v1349
    %v1442 = vpop.f32.mrf.mxu0
    %v1443 = vadd.f32 %v1370, %v1442
    %v1444 = vpop.f32.mrf.mxu0
    %1445 = vdwg.mxu0
    %v1446 = vmax.f32 %v1438, 0.0
    %v1447 = vmax.f32 %v1443, 0.0
    %v1448 = vld [vmem:[#allocation5 + $0x780] sm:$0xff]
    %v1449 = vld [vmem:[#allocation5 + $0x788] sm:$0xff]
    %v1450 = vld [vmem:[#allocation5 + $0x790] sm:$0xff]
    %v1451 = vld [vmem:[#allocation5 + $0x798] sm:$0xff]
    %v1452 = vld [vmem:[#allocation5 + $0x7a0] sm:$0xff]
    %v1453 = vld [vmem:[#allocation5 + $0x7a8] sm:$0xff]
    %v1454 = vld [vmem:[#allocation5 + $0x7b0] sm:$0xff]
    %v1455 = vld [vmem:[#allocation5 + $0x7b8] sm:$0xff]
    %v1456 = vld [vmem:[#allocation5 + $0x7c0] sm:$0xff]
    %v1457 = vld [vmem:[#allocation5 + $0x7c8] sm:$0xff]
    %v1458 = vld [vmem:[#allocation5 + $0x7d0] sm:$0xff]
    %v1459 = vld [vmem:[#allocation5 + $0x7d8] sm:$0xff]
    %v1460 = vld [vmem:[#allocation5 + $0x7e0] sm:$0xff]
    %v1461 = vld [vmem:[#allocation5 + $0x7e8] sm:$0xff]
    %v1462 = vld [vmem:[#allocation5 + $0x7f0] sm:$0xff]
    %v1463 = vld [vmem:[#allocation5 + $0x7f8] sm:$0xff]
    %v1464 = vld [vmem:[#allocation7 + $0xe] sm:$0x1]
    %v1465 = vlaneseq
    %v1466 = vshrl.u32 %v1465, 7
    %v1467 = vsub.s32 0, %v1466
    %v1468 = vrot.slane %v1464, %v1467
    %1469 = vmatprep.subr.mxu0 0.0
    %1470 = vmatpush1.msra.mxu0 %v1463
    %1471 = vmatprep.subr.mxu0 0.0
    %1472 = vmatpush1.msra.mxu0 %v1462
    %1473 = vmatprep.subr.mxu0 0.0
    %1474 = vmatpush1.msra.mxu0 %v1461
    %1475 = vmatprep.subr.mxu0 0.0
    %1476 = vmatpush1.msra.mxu0 %v1460
    %1477 = vmatprep.subr.mxu0 0.0
    %1478 = vmatpush1.msra.mxu0 %v1459
    %1479 = vmatprep.subr.mxu0 0.0
    %1480 = vmatpush1.msra.mxu0 %v1458
    %1481 = vmatprep.subr.mxu0 0.0
    %1482 = vmatpush1.msra.mxu0 %v1457
    %1483 = vmatprep.subr.mxu0 0.0
    %1484 = vmatpush1.msra.mxu0 %v1456
    %1485 = vmatprep.subr.mxu0 0.0
    %1486 = vmatpush1.msra.mxu0 %v1455
    %1487 = vmatprep.subr.mxu0 0.0
    %1488 = vmatpush1.msra.mxu0 %v1454
    %1489 = vmatprep.subr.mxu0 0.0
    %1490 = vmatpush1.msra.mxu0 %v1453
    %1491 = vmatprep.subr.mxu0 0.0
    %1492 = vmatpush1.msra.mxu0 %v1452
    %1493 = vmatprep.subr.mxu0 0.0
    %1494 = vmatpush1.msra.mxu0 %v1451
    %1495 = vmatprep.subr.mxu0 0.0
    %1496 = vmatpush1.msra.mxu0 %v1450
    %1497 = vmatprep.subr.mxu0 0.0
    %1498 = vmatpush1.msra.mxu0 %v1449
    %1499 = vmatprep.subr.mxu0 0.0
    %1500 = vmatpush1.msra.mxu0 %v1448
    %1501 = vmatprep.subr.mxu0 0.0
    %1502 = vmatpush2.msra.mxu0 0.0
    %1503 = vmatprep.subr.mxu0 0.0
    %1504 = vmatpush2.msra.mxu0 0.0
    %1505 = vmatprep.subr.mxu0 0.0
    %1506 = vmatpush2.msra.mxu0 0.0
    %1507 = vmatprep.subr.mxu0 0.0
    %1508 = vmatpush2.msra.mxu0 0.0
    %1509 = vmatprep.subr.mxu0 0.0
    %1510 = vmatpush2.msra.mxu0 0.0
    %1511 = vmatprep.subr.mxu0 0.0
    %1512 = vmatpush2.msra.mxu0 0.0
    %1513 = vmatprep.subr.mxu0 0.0
    %1514 = vmatpush2.msra.mxu0 0.0
    %1515 = vmatprep.subr.mxu0 0.0
    %1516 = vmatpush2.msra.mxu0 0.0
    %1517 = vmatprep.subr.mxu0 0.0
    %1518 = vmatpush2.msra.mxu0 0.0
    %1519 = vmatprep.subr.mxu0 0.0
    %1520 = vmatpush2.msra.mxu0 0.0
    %1521 = vmatprep.subr.mxu0 0.0
    %1522 = vmatpush2.msra.mxu0 0.0
    %1523 = vmatprep.subr.mxu0 0.0
    %1524 = vmatpush2.msra.mxu0 0.0
    %1525 = vmatprep.subr.mxu0 0.0
    %1526 = vmatpush2.msra.mxu0 0.0
    %1527 = vmatprep.subr.mxu0 0.0
    %1528 = vmatpush2.msra.mxu0 0.0
    %1529 = vmatprep.subr.mxu0 0.0
    %1530 = vmatpush2.msra.mxu0 0.0
    %1531 = vmatprep.subr.mxu0 0.0
    %1532 = vmatpush2.msra.mxu0 0.0
    %1533 = vmatprep.mubr.f32.mxu0 0.0
    %1534 = vmatmul.mubr.f32.gmra.mxu0 %v1446
    %v1535 = vpop.f32.mrf.mxu0
    %v1536 = vadd.f32 %v1468, %v1535
    %v1537 = vpop.f32.mrf.mxu0
    %1538 = vmatprep.mubr.f32.mxu0 0.0
    %1539 = vmatmul.mubr.f32.gmra.mxu0 %v1447
    %v1540 = vpop.f32.mrf.mxu0
    %v1541 = vadd.f32 %v1468, %v1540
    %v1542 = vpop.f32.mrf.mxu0
    %1543 = vdwg.mxu0
    %1544 = vst [vmem:[#allocation8] sm:$0xff] %v1536
    %1545 = vst [vmem:[#allocation8 + $0x8] sm:$0xff] %v1541
    // Predicated region
    $region26: #{tpu_custom_call.1} parent=1 // pred_check
      _
    $region27: #{tpu_custom_call.1} parent=1 // pred_check_branch
      %1547 = sbr.rel (0) target = $region29
    $region28: #{tpu_custom_call.1} parent=1 // pred_region
      %s1549 = ssub.s32 256, 256
      %1550 = vsyncadd [#allocation4], %s1549
      %s1551 = sshll.u32 [#allocation8], 4
      %s1552 = int_to_ptr.vmem [resolvable:$true] %s1551
      %1557 = dma.vmem_to_hbm [thread:$0]  %s1552, 256, %s3, [#allocation4], 128, 128, 8
    $region29: #{tpu_custom_call.1} parent=1 // pred_fallthru
      _
    // Predicated region
    $region30: #{tpu_custom_call.1} parent=1 // pred_check
      _
    $region31: #{tpu_custom_call.1} parent=1 // pred_check_branch
      %1559 = sbr.rel (0) target = $region33
    $region32: #{tpu_custom_call.1} parent=1 // pred_region
      %1560 = dma.done [#allocation4], 256
    $region33: #{tpu_custom_call.1} parent=1 // pred_fallthru
      _
    %1561 = vsyncpa [#allocation3], 1
    %1562 = vsyncpa [#allocation6], 1
    %1563 = vsyncpa [#allocation4], 1

</llo_original>
